<compile_context>
chip_gen: v7x
topology: tpu7x:2x2x1
jax: 0.10.0
libtpu: 0.0.40
codegen_flags: <defaults>
</compile_context>

<pallas_src>
import functools

import jax
import jax.numpy as jnp
from jax.experimental import pallas as pl
from jax.experimental.pallas import tpu as pltpu

_LANE = 128
_NORM_EPS = 1e-12


def _round_up(x, m):
    return ((x + m - 1) // m) * m


def _pad2d(a, rows, cols):
    r, c = a.shape
    if r == rows and c == cols:
        return a
    return jnp.pad(a, ((0, rows - r), (0, cols - c)))


def _vmem_capacity_bytes():
    # Per-core VMEM: 128 MiB on v5e/v6e, 64 MiB on v7x.
    try:
        info = pltpu.get_tpu_info()
        cap = getattr(info, "vmem_capacity_bytes", None)
        if cap:
            return int(cap)
    except Exception:
        pass
    return 128 * 1024 * 1024


# ----------------------------------------------------------------------------
# Pallas kernel: fused (synopsis + clip) 2-layer MLP embedders + L2 norm
# ----------------------------------------------------------------------------
def _embed_branch(x_ref, w1_ref, b1_ref, w2_ref, b2_ref, o_ref):
    # x : [TB, F] f32   w1 : [F, H] bf16   b1 : [1, H] f32
    # w2: [H, E] bf16   b2 : [1, E] f32    o  : [TB, E] out_dtype
    x = x_ref[...].astype(w1_ref.dtype)               # f32 -> bf16 on the VPU
    h = jnp.dot(x, w1_ref[...], preferred_element_type=jnp.float32)
    h = jnp.maximum(h + b1_ref[...], 0.0)             # bias + ReLU in f32
    e = jnp.dot(h.astype(w2_ref.dtype), w2_ref[...],
                preferred_element_type=jnp.float32)
    e = e + b2_ref[...]
    # L2 normalize (matches F.normalize(p=2, eps=1e-12) == e / max(||e||, eps)):
    # rsqrt of the squared norm clamped at eps^2 -> one EUP op + a VPU mul.
    ss = jnp.sum(e * e, axis=-1, keepdims=True)        # XLU cross-lane reduce
    inv = jax.lax.rsqrt(jnp.maximum(ss, _NORM_EPS * _NORM_EPS))
    o_ref[...] = (e * inv).astype(o_ref.dtype)


def _fused_cross_modal_kernel(sx_ref, sw1_ref, sb1_ref, sw2_ref, sb2_ref,
                              cx_ref, cw1_ref, cb1_ref, cw2_ref, cb2_ref,
                              so_ref, co_ref):
    _embed_branch(sx_ref, sw1_ref, sb1_ref, sw2_ref, sb2_ref, so_ref)
    _embed_branch(cx_ref, cw1_ref, cb1_ref, cw2_ref, cb2_ref, co_ref)


def prepare_embedder_params(w1, b1, w2, b2):
    """Pad to lane-dense shapes and cast weights to bf16 (done once at init)."""
    F, H = w1.shape
    H2, E = w2.shape
    assert H == H2
    F_p, H_p, E_p = (_round_up(F, _LANE), _round_up(H, _LANE),
                     _round_up(E, _LANE))
    w1p = _pad2d(w1.astype(jnp.float32), F_p, H_p).astype(jnp.bfloat16)
    w2p = _pad2d(w2.astype(jnp.float32), H_p, E_p).astype(jnp.bfloat16)
    b1p = _pad2d(b1.reshape(1, H).astype(jnp.float32), 1, H_p)
    b2p = _pad2d(b2.reshape(1, E).astype(jnp.float32), 1, E_p)
    return (w1p, b1p, w2p, b2p)


def cross_modal_embed(syn_x, syn_params, clip_x, clip_params, embed_dim, *,
                      batch_tile=512, out_dtype=jnp.float32):
    """Fused embedders for both modalities in a single pallas_call.

    syn_x: [B, Fs] f32, clip_x: [B, Fc] f32; *_params from
    prepare_embedder_params.  Returns (syn_embed [B, E], clip_embed [B, E]).
    """
    sw1, sb1, sw2, sb2 = syn_params
    cw1, cb1, cw2, cb2 = clip_params

    B, Fs = syn_x.shape
    Bc, Fc = clip_x.shape
    assert B == Bc
    Fs_p, Hs_p = sw1.shape
    Hc_check, E_p = sw2.shape
    assert Hs_p == Hc_check
    Fc_p, Hc_p = cw1.shape
    assert cw2.shape == (Hc_p, E_p)
    assert Fs <= Fs_p and Fc <= Fc_p and embed_dim <= E_p

    f32, bf16 = 4, 2
    out_itemsize = jnp.dtype(out_dtype).itemsize
    weight_bytes = (Fs_p * Hs_p + Hs_p * E_p + Fc_p * Hc_p + Hc_p * E_p) * bf16
    bias_bytes = (Hs_p + Hc_p + 2 * E_p) * f32

    def vmem_est(tb, weight_bufs):
        return (2 * tb * (Fs_p + Fc_p) * f32            # f32 x tiles (2 bufs)
                + 2 * 2 * tb * E_p * out_itemsize       # two outputs (2 bufs)
                + weight_bufs * (weight_bytes + bias_bytes)
                + tb * (Hs_p + Hc_p + 2 * E_p) * f32)   # in-kernel temporaries

    vmem_budget = int(0.75 * _vmem_capacity_bytes())    # ~96 MiB v5e/v6e, ~48 MiB v7x

    # Batch tile: multiples of 256 (full MXU M passes on v6e/v7x) for large
    # batches, minimum 16 rows (bf16 sublane packing) for small ones.
    if B >= 256:
        TB = min(_round_up(batch_tile, 256), _round_up(B, 256))
    else:
        TB = _round_up(B, 16)
    # Shrink the tile if the (single-buffered-weight) estimate exceeds budget.
    while TB > 256 and vmem_est(TB, 1) > vmem_budget:
        TB = _round_up(TB // 2, 256)
    # Prefer >=2 grid steps when the batch allows it so the "parallel" axis
    # can be megacore-sharded across v7x's 2 TensorCores.
    if TB >= 512 and _round_up(B, TB) // TB < 2:
        TB = _round_up(TB // 2, 16)
    B_p = _round_up(B, TB)
    grid = (B_p // TB,)

    # Activations stay f32 (no wrapper cast pass); pad only if needed.
    sx = _pad2d(syn_x, B_p, Fs_p)
    cx = _pad2d(clip_x, B_p, Fc_p)

    flops = 2 * B_p * (Fs_p * Hs_p + Hs_p * E_p + Fc_p * Hc_p + Hc_p * E_p)
    bytes_accessed = int(B_p * (Fs_p + Fc_p) * f32 + weight_bytes + bias_bytes
                         + 2 * B_p * E_p * out_itemsize)
    cost = pl.CostEstimate(flops=int(flops), transcendentals=int(2 * B_p),
                           bytes_accessed=bytes_accessed)

    tile = lambda i: (i, 0)     # batch-tiled operands
    const = lambda i: (0, 0)    # weights/biases: fetched once, VMEM-resident

    def build(single_buffer_weights):
        if single_buffer_weights:
            wspec = functools.partial(pl.BlockSpec, index_map=const,
                                      pipeline_mode=pl.Buffered(1))
        else:
            wspec = functools.partial(pl.BlockSpec, index_map=const)
        est = vmem_est(TB, 1 if single_buffer_weights else 2)
        vmem_limit = int(min(max(int(1.25 * est), 16 * 1024 * 1024),
                             vmem_budget))
        return pl.pallas_call(
            _fused_cross_modal_kernel,
            out_shape=(
                jax.ShapeDtypeStruct((B_p, E_p), out_dtype),
                jax.ShapeDtypeStruct((B_p, E_p), out_dtype),
            ),
            grid_spec=pltpu.PrefetchScalarGridSpec(
                num_scalar_prefetch=0,
                grid=grid,
                in_specs=[
                    pl.BlockSpec((TB, Fs_p), tile),
                    wspec((Fs_p, Hs_p)),
                    wspec((1, Hs_p)),
                    wspec((Hs_p, E_p)),
                    wspec((1, E_p)),
                    pl.BlockSpec((TB, Fc_p), tile),
                    wspec((Fc_p, Hc_p)),
                    wspec((1, Hc_p)),
                    wspec((Hc_p, E_p)),
                    wspec((1, E_p)),
                ],
                out_specs=(
                    pl.BlockSpec((TB, E_p), tile),
                    pl.BlockSpec((TB, E_p), tile),
                ),
            ),
            compiler_params=pltpu.CompilerParams(
                dimension_semantics=("parallel",),
                vmem_limit_bytes=vmem_limit,
            ),
            cost_estimate=cost,
        )

    operands = (sx, sw1, sb1, sw2, sb2, cx, cw1, cb1, cw2, cb2)
    try:
        syn_out, clip_out = build(True)(*operands)
    except Exception:
        # Fallback if this JAX build rejects Buffered(1) on grid-invariant
        # inputs: plain (default double-buffered) specs.
        syn_out, clip_out = build(False)(*operands)

    return syn_out[:B, :embed_dim], clip_out[:B, :embed_dim]


# ----------------------------------------------------------------------------
# CrossModalNet (JAX/Pallas version)
# ----------------------------------------------------------------------------
def _init_linear(key, fan_in, fan_out):
    kw, kb = jax.random.split(key)
    lim = 1.0 / jnp.sqrt(jnp.float32(fan_in))
    w = jax.random.uniform(kw, (fan_in, fan_out), jnp.float32, -lim, lim)
    b = jax.random.uniform(kb, (fan_out,), jnp.float32, -lim, lim)
    return w, b


class CrossModalNetPallas:
    def __init__(self, f_syn, f_clip, hidden, embed, reduce_flag=True,
                 key_name="none", seed=0, batch_tile=512,
                 out_dtype=jnp.float32):
        self.reduce_flag = reduce_flag
        self.key = key_name
        self.batch_tile = batch_tile
        self.out_dtype = out_dtype
        self.embed_dim = embed
        root = jax.random.PRNGKey(seed)
        ks = jax.random.split(root, 4)
        # synopsis embedder params
        self.s_w1, self.s_b1 = _init_linear(ks[0], f_syn, hidden)
        self.s_w2, self.s_b2 = _init_linear(ks[1], hidden, embed)
        # video (clip) embedder params
        self.v_w1, self.v_b1 = _init_linear(ks[2], f_clip, hidden)
        self.v_w2, self.v_b2 = _init_linear(ks[3], hidden, embed)
        # Padded bf16 weights / f32 biases prepared ONCE (not per forward).
        self.syn_params = prepare_embedder_params(
            self.s_w1, self.s_b1, self.s_w2, self.s_b2)
        self.clip_params = prepare_embedder_params(
            self.v_w1, self.v_b1, self.v_w2, self.v_b2)

    def forward_train(self, syn, clip, meta):
        """syn: [B, 1, Fs]  clip: [B, N=1, Fc]  meta: list of dicts with lens."""
        clip = jnp.squeeze(clip, axis=1)   # [B, Fc]
        syn = jnp.squeeze(syn, axis=1)     # [B, Fs]

        clens = jnp.asarray([m["c_{}_len".format(self.key)] for m in meta],
                            dtype=jnp.int32)
        slens = jnp.asarray([m["s_{}_len".format(self.key)] for m in meta],
                            dtype=jnp.int32)

        syn_embed, clip_embed = cross_modal_embed(
            syn, self.syn_params, clip, self.clip_params, self.embed_dim,
            batch_tile=self.batch_tile, out_dtype=self.out_dtype)

        outputs = {}
        outputs["syn_{}_embed".format(self.key)] = syn_embed
        outputs["clip_{}_embed".format(self.key)] = clip_embed
        if not self.reduce_flag:
            outputs["syn_{}_len".format(self.key)] = slens
            outputs["clip_{}_len".format(self.key)] = clens
        return outputs

    def __call__(self, syn, clip, meta, return_loss=True, **kwargs):
        # forward() routes both branches to forward_train in the original code.
        return self.forward_train(syn, clip, meta)


# ----------------------------------------------------------------------------
# Reference (plain JAX, emulating the kernel's bf16 matmul inputs)
# ----------------------------------------------------------------------------
def _ref_embed(x, w1, b1, w2, b2):
    xb = x.astype(jnp.bfloat16)
    w1b = w1.astype(jnp.bfloat16)
    w2b = w2.astype(jnp.bfloat16)
    h = jnp.dot(xb, w1b, preferred_element_type=jnp.float32) + b1
    h = jnp.maximum(h, 0.0)
    e = jnp.dot(h.astype(jnp.bfloat16), w2b,
                preferred_element_type=jnp.float32) + b2
    norm = jnp.sqrt(jnp.sum(e * e, axis=-1, keepdims=True))
    return e / jnp.maximum(norm, _NORM_EPS)


if __name__ == "__main__":
    B, Fs, Fc, H, E = 2, 32, 48, 64, 32

    key = jax.random.PRNGKey(0)
    k_syn, k_clip = jax.random.split(key)
    syn = jax.random.normal(k_syn, (B, 1, Fs), dtype=jnp.float32)
    clip = jax.random.normal(k_clip, (B, 1, Fc), dtype=jnp.float32)
    meta = [{"c_none_len": 7, "s_none_len": 5} for _ in range(B)]

    net = CrossModalNetPallas(f_syn=Fs, f_clip=Fc, hidden=H, embed=E,
                              reduce_flag=True, key_name="none", seed=0)

    outputs = net(syn, clip, meta, return_loss=True)
    jax.block_until_ready(outputs)

    # Correctness check vs. plain-JAX reference (same bf16-input matmuls).
    syn2, clip2 = jnp.squeeze(syn, 1), jnp.squeeze(clip, 1)
    ref_s = _ref_embed(syn2, net.s_w1, net.s_b1, net.s_w2, net.s_b2)
    ref_c = _ref_embed(clip2, net.v_w1, net.v_b1, net.v_w2, net.v_b2)
    assert outputs["syn_none_embed"].shape == (B, E)
    assert outputs["clip_none_embed"].shape == (B, E)
    assert jnp.allclose(outputs["syn_none_embed"], ref_s, atol=1e-4, rtol=1e-4)
    assert jnp.allclose(outputs["clip_none_embed"], ref_c, atol=1e-4, rtol=1e-4)

    print("KERNEL_OK")
</pallas_src>

<mosaic_0001>
module attributes {stable_mosaic.version = 11 : i64} {
  func.func @_fused_cross_modal_kernel(%arg0: i32, %arg1: memref<16x128xf32, #tpu.memory_space<vmem>>, %arg2: memref<128x128xbf16, #tpu.memory_space<vmem>>, %arg3: memref<1x128xf32, #tpu.memory_space<vmem>>, %arg4: memref<128x128xbf16, #tpu.memory_space<vmem>>, %arg5: memref<1x128xf32, #tpu.memory_space<vmem>>, %arg6: memref<16x128xf32, #tpu.memory_space<vmem>>, %arg7: memref<128x128xbf16, #tpu.memory_space<vmem>>, %arg8: memref<1x128xf32, #tpu.memory_space<vmem>>, %arg9: memref<128x128xbf16, #tpu.memory_space<vmem>>, %arg10: memref<1x128xf32, #tpu.memory_space<vmem>>, %arg11: memref<16x128xf32, #tpu.memory_space<vmem>>, %arg12: memref<16x128xf32, #tpu.memory_space<vmem>>) attributes {dimension_semantics = [#tpu.dimension_semantics<parallel>], iteration_bounds = array<i64: 1>, scalar_prefetch = 0 : i64, scratch_operands = 0 : i64, tpu.core_type = #tpu.core_type<tc>, window_params = [{transform_indices = @transform_0, window_bounds = array<i64: 16, 128>}, {pipeline_mode = #tpu.pipeline_mode<synchronous>, transform_indices = @transform_1, window_bounds = array<i64: 128, 128>}, {pipeline_mode = #tpu.pipeline_mode<synchronous>, transform_indices = @transform_2, window_bounds = array<i64: 1, 128>}, {pipeline_mode = #tpu.pipeline_mode<synchronous>, transform_indices = @transform_3, window_bounds = array<i64: 128, 128>}, {pipeline_mode = #tpu.pipeline_mode<synchronous>, transform_indices = @transform_4, window_bounds = array<i64: 1, 128>}, {transform_indices = @transform_5, window_bounds = array<i64: 16, 128>}, {pipeline_mode = #tpu.pipeline_mode<synchronous>, transform_indices = @transform_6, window_bounds = array<i64: 128, 128>}, {pipeline_mode = #tpu.pipeline_mode<synchronous>, transform_indices = @transform_7, window_bounds = array<i64: 1, 128>}, {pipeline_mode = #tpu.pipeline_mode<synchronous>, transform_indices = @transform_8, window_bounds = array<i64: 128, 128>}, {pipeline_mode = #tpu.pipeline_mode<synchronous>, transform_indices = @transform_9, window_bounds = array<i64: 1, 128>}, {transform_indices = @transform_10, window_bounds = array<i64: 16, 128>}, {transform_indices = @transform_11, window_bounds = array<i64: 16, 128>}]} {
    %c0 = arith.constant 0 : index
    %c0_0 = arith.constant 0 : index
    %0 = vector.load %arg1[%c0, %c0_0] : memref<16x128xf32, #tpu.memory_space<vmem>>, vector<16x128xf32>
    %1 = arith.truncf %0 : vector<16x128xf32> to vector<16x128xbf16>
    %c0_1 = arith.constant 0 : index
    %c0_2 = arith.constant 0 : index
    %2 = vector.load %arg2[%c0_1, %c0_2] : memref<128x128xbf16, #tpu.memory_space<vmem>>, vector<128x128xbf16>
    %cst = arith.constant dense<0.000000e+00> : vector<16x128xf32>
    %3 = tpu.matmul %1, %2, %cst {dimension_numbers = #tpu.dot_dimension_numbers<[1], [0], [0], [1], [0, 0, 1, 1], [], []>} : vector<16x128xbf16>, vector<128x128xbf16>, vector<16x128xf32> -> vector<16x128xf32>
    %c0_3 = arith.constant 0 : index
    %c0_4 = arith.constant 0 : index
    %4 = vector.load %arg3[%c0_3, %c0_4] : memref<1x128xf32, #tpu.memory_space<vmem>>, vector<1x128xf32>
    %5 = vector.broadcast %4 : vector<1x128xf32> to vector<16x128xf32>
    %6 = arith.addf %3, %5 : vector<16x128xf32>
    %cst_5 = arith.constant 0.000000e+00 : f32
    %7 = vector.broadcast %cst_5 : f32 to vector<16x128xf32>
    %8 = arith.maximumf %6, %7 : vector<16x128xf32>
    %9 = arith.truncf %8 : vector<16x128xf32> to vector<16x128xbf16>
    %c0_6 = arith.constant 0 : index
    %c0_7 = arith.constant 0 : index
    %10 = vector.load %arg4[%c0_6, %c0_7] : memref<128x128xbf16, #tpu.memory_space<vmem>>, vector<128x128xbf16>
    %cst_8 = arith.constant dense<0.000000e+00> : vector<16x128xf32>
    %11 = tpu.matmul %9, %10, %cst_8 {dimension_numbers = #tpu.dot_dimension_numbers<[1], [0], [0], [1], [0, 0, 1, 1], [], []>} : vector<16x128xbf16>, vector<128x128xbf16>, vector<16x128xf32> -> vector<16x128xf32>
    %c0_9 = arith.constant 0 : index
    %c0_10 = arith.constant 0 : index
    %12 = vector.load %arg5[%c0_9, %c0_10] : memref<1x128xf32, #tpu.memory_space<vmem>>, vector<1x128xf32>
    %13 = vector.broadcast %12 : vector<1x128xf32> to vector<16x128xf32>
    %14 = arith.addf %11, %13 : vector<16x128xf32>
    %15 = arith.mulf %14, %14 : vector<16x128xf32>
    %cst_11 = arith.constant dense<0.000000e+00> : vector<16xf32>
    %16 = vector.multi_reduction <add>, %15, %cst_11 [1] : vector<16x128xf32> to vector<16xf32>
    %17 = vector.shape_cast %16 : vector<16xf32> to vector<16x1xf32>
    %cst_12 = arith.constant 1.000000e-24 : f32
    %18 = vector.broadcast %cst_12 : f32 to vector<16x1xf32>
    %19 = arith.maximumf %17, %18 : vector<16x1xf32>
    %20 = math.rsqrt %19 : vector<16x1xf32>
    %21 = vector.broadcast %20 : vector<16x1xf32> to vector<16x128xf32>
    %22 = arith.mulf %14, %21 : vector<16x128xf32>
    %c0_13 = arith.constant 0 : index
    %c0_14 = arith.constant 0 : index
    %23 = vector.load %arg11[%c0_13, %c0_14] : memref<16x128xf32, #tpu.memory_space<vmem>>, vector<16x128xf32>
    tpu.vector_store %arg11[%c0_13, %c0_14], %22 {strides = array<i32>} : memref<16x128xf32, #tpu.memory_space<vmem>>, vector<16x128xf32>,
    %c0_15 = arith.constant 0 : index
    %c0_16 = arith.constant 0 : index
    %24 = vector.load %arg6[%c0_15, %c0_16] : memref<16x128xf32, #tpu.memory_space<vmem>>, vector<16x128xf32>
    %25 = arith.truncf %24 : vector<16x128xf32> to vector<16x128xbf16>
    %c0_17 = arith.constant 0 : index
    %c0_18 = arith.constant 0 : index
    %26 = vector.load %arg7[%c0_17, %c0_18] : memref<128x128xbf16, #tpu.memory_space<vmem>>, vector<128x128xbf16>
    %cst_19 = arith.constant dense<0.000000e+00> : vector<16x128xf32>
    %27 = tpu.matmul %25, %26, %cst_19 {dimension_numbers = #tpu.dot_dimension_numbers<[1], [0], [0], [1], [0, 0, 1, 1], [], []>} : vector<16x128xbf16>, vector<128x128xbf16>, vector<16x128xf32> -> vector<16x128xf32>
    %c0_20 = arith.constant 0 : index
    %c0_21 = arith.constant 0 : index
    %28 = vector.load %arg8[%c0_20, %c0_21] : memref<1x128xf32, #tpu.memory_space<vmem>>, vector<1x128xf32>
    %29 = vector.broadcast %28 : vector<1x128xf32> to vector<16x128xf32>
    %30 = arith.addf %27, %29 : vector<16x128xf32>
    %cst_22 = arith.constant 0.000000e+00 : f32
    %31 = vector.broadcast %cst_22 : f32 to vector<16x128xf32>
    %32 = arith.maximumf %30, %31 : vector<16x128xf32>
    %33 = arith.truncf %32 : vector<16x128xf32> to vector<16x128xbf16>
    %c0_23 = arith.constant 0 : index
    %c0_24 = arith.constant 0 : index
    %34 = vector.load %arg9[%c0_23, %c0_24] : memref<128x128xbf16, #tpu.memory_space<vmem>>, vector<128x128xbf16>
    %cst_25 = arith.constant dense<0.000000e+00> : vector<16x128xf32>
    %35 = tpu.matmul %33, %34, %cst_25 {dimension_numbers = #tpu.dot_dimension_numbers<[1], [0], [0], [1], [0, 0, 1, 1], [], []>} : vector<16x128xbf16>, vector<128x128xbf16>, vector<16x128xf32> -> vector<16x128xf32>
    %c0_26 = arith.constant 0 : index
    %c0_27 = arith.constant 0 : index
    %36 = vector.load %arg10[%c0_26, %c0_27] : memref<1x128xf32, #tpu.memory_space<vmem>>, vector<1x128xf32>
    %37 = vector.broadcast %36 : vector<1x128xf32> to vector<16x128xf32>
    %38 = arith.addf %35, %37 : vector<16x128xf32>
    %39 = arith.mulf %38, %38 : vector<16x128xf32>
    %cst_28 = arith.constant dense<0.000000e+00> : vector<16xf32>
    %40 = vector.multi_reduction <add>, %39, %cst_28 [1] : vector<16x128xf32> to vector<16xf32>
    %41 = vector.shape_cast %40 : vector<16xf32> to vector<16x1xf32>
    %cst_29 = arith.constant 1.000000e-24 : f32
    %42 = vector.broadcast %cst_29 : f32 to vector<16x1xf32>
    %43 = arith.maximumf %41, %42 : vector<16x1xf32>
    %44 = math.rsqrt %43 : vector<16x1xf32>
    %45 = vector.broadcast %44 : vector<16x1xf32> to vector<16x128xf32>
    %46 = arith.mulf %38, %45 : vector<16x128xf32>
    %c0_30 = arith.constant 0 : index
    %c0_31 = arith.constant 0 : index
    %47 = vector.load %arg12[%c0_30, %c0_31] : memref<16x128xf32, #tpu.memory_space<vmem>>, vector<16x128xf32>
    tpu.vector_store %arg12[%c0_30, %c0_31], %46 {strides = array<i32>} : memref<16x128xf32, #tpu.memory_space<vmem>>, vector<16x128xf32>,
    return
  }
  func.func @transform_0(%arg0: i32) -> (i32, i32) {
    %c0_i32 = arith.constant 0 : i32
    %c0_i32_0 = arith.constant 0 : i32
    return %arg0, %c0_i32 : i32, i32
  }
  func.func @transform_1(%arg0: i32) -> (i32, i32) {
    %c0_i32 = arith.constant 0 : i32
    %c0_i32_0 = arith.constant 0 : i32
    %c0_i32_1 = arith.constant 0 : i32
    return %c0_i32, %c0_i32_0 : i32, i32
  }
  func.func @transform_2(%arg0: i32) -> (i32, i32) {
    %c0_i32 = arith.constant 0 : i32
    %c0_i32_0 = arith.constant 0 : i32
    %c0_i32_1 = arith.constant 0 : i32
    return %c0_i32, %c0_i32_0 : i32, i32
  }
  func.func @transform_3(%arg0: i32) -> (i32, i32) {
    %c0_i32 = arith.constant 0 : i32
    %c0_i32_0 = arith.constant 0 : i32
    %c0_i32_1 = arith.constant 0 : i32
    return %c0_i32, %c0_i32_0 : i32, i32
  }
  func.func @transform_4(%arg0: i32) -> (i32, i32) {
    %c0_i32 = arith.constant 0 : i32
    %c0_i32_0 = arith.constant 0 : i32
    %c0_i32_1 = arith.constant 0 : i32
    return %c0_i32, %c0_i32_0 : i32, i32
  }
  func.func @transform_5(%arg0: i32) -> (i32, i32) {
    %c0_i32 = arith.constant 0 : i32
    %c0_i32_0 = arith.constant 0 : i32
    return %arg0, %c0_i32 : i32, i32
  }
  func.func @transform_6(%arg0: i32) -> (i32, i32) {
    %c0_i32 = arith.constant 0 : i32
    %c0_i32_0 = arith.constant 0 : i32
    %c0_i32_1 = arith.constant 0 : i32
    return %c0_i32, %c0_i32_0 : i32, i32
  }
  func.func @transform_7(%arg0: i32) -> (i32, i32) {
    %c0_i32 = arith.constant 0 : i32
    %c0_i32_0 = arith.constant 0 : i32
    %c0_i32_1 = arith.constant 0 : i32
    return %c0_i32, %c0_i32_0 : i32, i32
  }
  func.func @transform_8(%arg0: i32) -> (i32, i32) {
    %c0_i32 = arith.constant 0 : i32
    %c0_i32_0 = arith.constant 0 : i32
    %c0_i32_1 = arith.constant 0 : i32
    return %c0_i32, %c0_i32_0 : i32, i32
  }
  func.func @transform_9(%arg0: i32) -> (i32, i32) {
    %c0_i32 = arith.constant 0 : i32
    %c0_i32_0 = arith.constant 0 : i32
    %c0_i32_1 = arith.constant 0 : i32
    return %c0_i32, %c0_i32_0 : i32, i32
  }
  func.func @transform_10(%arg0: i32) -> (i32, i32) {
    %c0_i32 = arith.constant 0 : i32
    %c0_i32_0 = arith.constant 0 : i32
    return %arg0, %c0_i32 : i32, i32
  }
  func.func @transform_11(%arg0: i32) -> (i32, i32) {
    %c0_i32 = arith.constant 0 : i32
    %c0_i32_0 = arith.constant 0 : i32
    return %arg0, %c0_i32 : i32, i32
  }
}

module attributes {stable_mosaic.version = 11 : i64} {
  func.func @_fused_cross_modal_kernel(%arg0: i32, %arg1: memref<16x128xf32, #tpu.memory_space<vmem>>, %arg2: memref<128x128xbf16, #tpu.memory_space<vmem>>, %arg3: memref<1x128xf32, #tpu.memory_space<vmem>>, %arg4: memref<128x128xbf16, #tpu.memory_space<vmem>>, %arg5: memref<1x128xf32, #tpu.memory_space<vmem>>, %arg6: memref<16x128xf32, #tpu.memory_space<vmem>>, %arg7: memref<128x128xbf16, #tpu.memory_space<vmem>>, %arg8: memref<1x128xf32, #tpu.memory_space<vmem>>, %arg9: memref<128x128xbf16, #tpu.memory_space<vmem>>, %arg10: memref<1x128xf32, #tpu.memory_space<vmem>>, %arg11: memref<16x128xf32, #tpu.memory_space<vmem>>, %arg12: memref<16x128xf32, #tpu.memory_space<vmem>>) attributes {dimension_semantics = [#tpu.dimension_semantics<parallel>], iteration_bounds = array<i64: 1>, scalar_prefetch = 0 : i64, scratch_operands = 0 : i64, tpu.core_type = #tpu.core_type<tc>, window_params = [{transform_indices = @transform_0, window_bounds = array<i64: 16, 128>}, {pipeline_mode = #tpu.pipeline_mode<synchronous>, transform_indices = @transform_1, window_bounds = array<i64: 128, 128>}, {pipeline_mode = #tpu.pipeline_mode<synchronous>, transform_indices = @transform_2, window_bounds = array<i64: 1, 128>}, {pipeline_mode = #tpu.pipeline_mode<synchronous>, transform_indices = @transform_3, window_bounds = array<i64: 128, 128>}, {pipeline_mode = #tpu.pipeline_mode<synchronous>, transform_indices = @transform_4, window_bounds = array<i64: 1, 128>}, {transform_indices = @transform_5, window_bounds = array<i64: 16, 128>}, {pipeline_mode = #tpu.pipeline_mode<synchronous>, transform_indices = @transform_6, window_bounds = array<i64: 128, 128>}, {pipeline_mode = #tpu.pipeline_mode<synchronous>, transform_indices = @transform_7, window_bounds = array<i64: 1, 128>}, {pipeline_mode = #tpu.pipeline_mode<synchronous>, transform_indices = @transform_8, window_bounds = array<i64: 128, 128>}, {pipeline_mode = #tpu.pipeline_mode<synchronous>, transform_indices = @transform_9, window_bounds = array<i64: 1, 128>}, {transform_indices = @transform_10, window_bounds = array<i64: 16, 128>}, {transform_indices = @transform_11, window_bounds = array<i64: 16, 128>}]} {
    %c0 = arith.constant 0 : index
    %c0_0 = arith.constant 0 : index
    %0 = vector.load %arg1[%c0, %c0_0] : memref<16x128xf32, #tpu.memory_space<vmem>>, vector<16x128xf32>
    %1 = arith.truncf %0 : vector<16x128xf32> to vector<16x128xbf16>
    %c0_1 = arith.constant 0 : index
    %c0_2 = arith.constant 0 : index
    %2 = vector.load %arg2[%c0_1, %c0_2] : memref<128x128xbf16, #tpu.memory_space<vmem>>, vector<128x128xbf16>
    %cst = arith.constant dense<0.000000e+00> : vector<16x128xf32>
    %3 = tpu.matmul %1, %2, %cst {dimension_numbers = #tpu.dot_dimension_numbers<[1], [0], [0], [1], [0, 0, 1, 1], [], []>} : vector<16x128xbf16>, vector<128x128xbf16>, vector<16x128xf32> -> vector<16x128xf32>
    %c0_3 = arith.constant 0 : index
    %c0_4 = arith.constant 0 : index
    %4 = vector.load %arg3[%c0_3, %c0_4] : memref<1x128xf32, #tpu.memory_space<vmem>>, vector<1x128xf32>
    %5 = vector.broadcast %4 : vector<1x128xf32> to vector<16x128xf32>
    %6 = arith.addf %3, %5 : vector<16x128xf32>
    %cst_5 = arith.constant 0.000000e+00 : f32
    %7 = vector.broadcast %cst_5 : f32 to vector<16x128xf32>
    %8 = arith.maximumf %6, %7 : vector<16x128xf32>
    %9 = arith.truncf %8 : vector<16x128xf32> to vector<16x128xbf16>
    %c0_6 = arith.constant 0 : index
    %c0_7 = arith.constant 0 : index
    %10 = vector.load %arg4[%c0_6, %c0_7] : memref<128x128xbf16, #tpu.memory_space<vmem>>, vector<128x128xbf16>
    %cst_8 = arith.constant dense<0.000000e+00> : vector<16x128xf32>
    %11 = tpu.matmul %9, %10, %cst_8 {dimension_numbers = #tpu.dot_dimension_numbers<[1], [0], [0], [1], [0, 0, 1, 1], [], []>} : vector<16x128xbf16>, vector<128x128xbf16>, vector<16x128xf32> -> vector<16x128xf32>
    %c0_9 = arith.constant 0 : index
    %c0_10 = arith.constant 0 : index
    %12 = vector.load %arg5[%c0_9, %c0_10] : memref<1x128xf32, #tpu.memory_space<vmem>>, vector<1x128xf32>
    %13 = vector.broadcast %12 : vector<1x128xf32> to vector<16x128xf32>
    %14 = arith.addf %11, %13 : vector<16x128xf32>
    %15 = arith.mulf %14, %14 : vector<16x128xf32>
    %cst_11 = arith.constant dense<0.000000e+00> : vector<16xf32>
    %16 = vector.multi_reduction <add>, %15, %cst_11 [1] : vector<16x128xf32> to vector<16xf32>
    %17 = vector.shape_cast %16 : vector<16xf32> to vector<16x1xf32>
    %cst_12 = arith.constant 1.000000e-24 : f32
    %18 = vector.broadcast %cst_12 : f32 to vector<16x1xf32>
    %19 = arith.maximumf %17, %18 : vector<16x1xf32>
    %20 = math.rsqrt %19 : vector<16x1xf32>
    %21 = vector.broadcast %20 : vector<16x1xf32> to vector<16x128xf32>
    %22 = arith.mulf %14, %21 : vector<16x128xf32>
    %c0_13 = arith.constant 0 : index
    %c0_14 = arith.constant 0 : index
    %23 = vector.load %arg11[%c0_13, %c0_14] : memref<16x128xf32, #tpu.memory_space<vmem>>, vector<16x128xf32>
    tpu.vector_store %arg11[%c0_13, %c0_14], %22 {strides = array<i32>} : memref<16x128xf32, #tpu.memory_space<vmem>>, vector<16x128xf32>,
    %c0_15 = arith.constant 0 : index
    %c0_16 = arith.constant 0 : index
    %24 = vector.load %arg6[%c0_15, %c0_16] : memref<16x128xf32, #tpu.memory_space<vmem>>, vector<16x128xf32>
    %25 = arith.truncf %24 : vector<16x128xf32> to vector<16x128xbf16>
    %c0_17 = arith.constant 0 : index
    %c0_18 = arith.constant 0 : index
    %26 = vector.load %arg7[%c0_17, %c0_18] : memref<128x128xbf16, #tpu.memory_space<vmem>>, vector<128x128xbf16>
    %cst_19 = arith.constant dense<0.000000e+00> : vector<16x128xf32>
    %27 = tpu.matmul %25, %26, %cst_19 {dimension_numbers = #tpu.dot_dimension_numbers<[1], [0], [0], [1], [0, 0, 1, 1], [], []>} : vector<16x128xbf16>, vector<128x128xbf16>, vector<16x128xf32> -> vector<16x128xf32>
    %c0_20 = arith.constant 0 : index
    %c0_21 = arith.constant 0 : index
    %28 = vector.load %arg8[%c0_20, %c0_21] : memref<1x128xf32, #tpu.memory_space<vmem>>, vector<1x128xf32>
    %29 = vector.broadcast %28 : vector<1x128xf32> to vector<16x128xf32>
    %30 = arith.addf %27, %29 : vector<16x128xf32>
    %cst_22 = arith.constant 0.000000e+00 : f32
    %31 = vector.broadcast %cst_22 : f32 to vector<16x128xf32>
    %32 = arith.maximumf %30, %31 : vector<16x128xf32>
    %33 = arith.truncf %32 : vector<16x128xf32> to vector<16x128xbf16>
    %c0_23 = arith.constant 0 : index
    %c0_24 = arith.constant 0 : index
    %34 = vector.load %arg9[%c0_23, %c0_24] : memref<128x128xbf16, #tpu.memory_space<vmem>>, vector<128x128xbf16>
    %cst_25 = arith.constant dense<0.000000e+00> : vector<16x128xf32>
    %35 = tpu.matmul %33, %34, %cst_25 {dimension_numbers = #tpu.dot_dimension_numbers<[1], [0], [0], [1], [0, 0, 1, 1], [], []>} : vector<16x128xbf16>, vector<128x128xbf16>, vector<16x128xf32> -> vector<16x128xf32>
    %c0_26 = arith.constant 0 : index
    %c0_27 = arith.constant 0 : index
    %36 = vector.load %arg10[%c0_26, %c0_27] : memref<1x128xf32, #tpu.memory_space<vmem>>, vector<1x128xf32>
    %37 = vector.broadcast %36 : vector<1x128xf32> to vector<16x128xf32>
    %38 = arith.addf %35, %37 : vector<16x128xf32>
    %39 = arith.mulf %38, %38 : vector<16x128xf32>
    %cst_28 = arith.constant dense<0.000000e+00> : vector<16xf32>
    %40 = vector.multi_reduction <add>, %39, %cst_28 [1] : vector<16x128xf32> to vector<16xf32>
    %41 = vector.shape_cast %40 : vector<16xf32> to vector<16x1xf32>
    %cst_29 = arith.constant 1.000000e-24 : f32
    %42 = vector.broadcast %cst_29 : f32 to vector<16x1xf32>
    %43 = arith.maximumf %41, %42 : vector<16x1xf32>
    %44 = math.rsqrt %43 : vector<16x1xf32>
    %45 = vector.broadcast %44 : vector<16x1xf32> to vector<16x128xf32>
    %46 = arith.mulf %38, %45 : vector<16x128xf32>
    %c0_30 = arith.constant 0 : index
    %c0_31 = arith.constant 0 : index
    %47 = vector.load %arg12[%c0_30, %c0_31] : memref<16x128xf32, #tpu.memory_space<vmem>>, vector<16x128xf32>
    tpu.vector_store %arg12[%c0_30, %c0_31], %46 {strides = array<i32>} : memref<16x128xf32, #tpu.memory_space<vmem>>, vector<16x128xf32>,
    return
  }
  func.func @transform_0(%arg0: i32) -> (i32, i32) {
    %c0_i32 = arith.constant 0 : i32
    %c0_i32_0 = arith.constant 0 : i32
    return %arg0, %c0_i32 : i32, i32
  }
  func.func @transform_1(%arg0: i32) -> (i32, i32) {
    %c0_i32 = arith.constant 0 : i32
    %c0_i32_0 = arith.constant 0 : i32
    %c0_i32_1 = arith.constant 0 : i32
    return %c0_i32, %c0_i32_0 : i32, i32
  }
  func.func @transform_2(%arg0: i32) -> (i32, i32) {
    %c0_i32 = arith.constant 0 : i32
    %c0_i32_0 = arith.constant 0 : i32
    %c0_i32_1 = arith.constant 0 : i32
    return %c0_i32, %c0_i32_0 : i32, i32
  }
  func.func @transform_3(%arg0: i32) -> (i32, i32) {
    %c0_i32 = arith.constant 0 : i32
    %c0_i32_0 = arith.constant 0 : i32
    %c0_i32_1 = arith.constant 0 : i32
    return %c0_i32, %c0_i32_0 : i32, i32
  }
  func.func @transform_4(%arg0: i32) -> (i32, i32) {
    %c0_i32 = arith.constant 0 : i32
    %c0_i32_0 = arith.constant 0 : i32
    %c0_i32_1 = arith.constant 0 : i32
    return %c0_i32, %c0_i32_0 : i32, i32
  }
  func.func @transform_5(%arg0: i32) -> (i32, i32) {
    %c0_i32 = arith.constant 0 : i32
    %c0_i32_0 = arith.constant 0 : i32
    return %arg0, %c0_i32 : i32, i32
  }
  func.func @transform_6(%arg0: i32) -> (i32, i32) {
    %c0_i32 = arith.constant 0 : i32
    %c0_i32_0 = arith.constant 0 : i32
    %c0_i32_1 = arith.constant 0 : i32
    return %c0_i32, %c0_i32_0 : i32, i32
  }
  func.func @transform_7(%arg0: i32) -> (i32, i32) {
    %c0_i32 = arith.constant 0 : i32
    %c0_i32_0 = arith.constant 0 : i32
    %c0_i32_1 = arith.constant 0 : i32
    return %c0_i32, %c0_i32_0 : i32, i32
  }
  func.func @transform_8(%arg0: i32) -> (i32, i32) {
    %c0_i32 = arith.constant 0 : i32
    %c0_i32_0 = arith.constant 0 : i32
    %c0_i32_1 = arith.constant 0 : i32
    return %c0_i32, %c0_i32_0 : i32, i32
  }
  func.func @transform_9(%arg0: i32) -> (i32, i32) {
    %c0_i32 = arith.constant 0 : i32
    %c0_i32_0 = arith.constant 0 : i32
    %c0_i32_1 = arith.constant 0 : i32
    return %c0_i32, %c0_i32_0 : i32, i32
  }
  func.func @transform_10(%arg0: i32) -> (i32, i32) {
    %c0_i32 = arith.constant 0 : i32
    %c0_i32_0 = arith.constant 0 : i32
    return %arg0, %c0_i32 : i32, i32
  }
  func.func @transform_11(%arg0: i32) -> (i32, i32) {
    %c0_i32 = arith.constant 0 : i32
    %c0_i32_0 = arith.constant 0 : i32
    return %arg0, %c0_i32 : i32, i32
  }
}

</mosaic_0001>

<llo_original>
// kernel: tpu_custom_call.1
$region0: #{tpu_custom_call.1}
  #allocation0 [shape = 'u32[]', space=smem, size = 0x4, offset = 0x4, fixed_abs, tag = 'smem constant byte address 0x4 - core index']
  #allocation1 [shape = 'u32[144,128]{1,0:T(1,128)}', space=vmem, size = 0x12000, scoped, tag = 'internal scratch']
  %s0 = inlined_call_operand.hbm [shape: f32[16,128], index: 0, kind: input, shape index: {}]
  %s1 = inlined_call_operand.hbm [shape: bf16[128,128], index: 1, kind: input, shape index: {}]
  %s2 = inlined_call_operand.vmem [shape: f32[1,128], index: 2, kind: input, shape index: {}]
  %s3 = inlined_call_operand.hbm [shape: bf16[128,128], index: 3, kind: input, shape index: {}]
  %s4 = inlined_call_operand.vmem [shape: f32[1,128], index: 4, kind: input, shape index: {}]
  %s5 = inlined_call_operand.vmem [shape: f32[16,128], index: 5, kind: input, shape index: {}]
  %s6 = inlined_call_operand.hbm [shape: bf16[128,128], index: 6, kind: input, shape index: {}]
  %s7 = inlined_call_operand.vmem [shape: f32[1,128], index: 7, kind: input, shape index: {}]
  %s8 = inlined_call_operand.hbm [shape: bf16[128,128], index: 8, kind: input, shape index: {}]
  %s9 = inlined_call_operand.vmem [shape: f32[1,128], index: 9, kind: input, shape index: {}]
  %s10 = inlined_call_operand.hbm [shape: f32[16,128], index: 10, kind: output, shape index: {0}]
  %s11 = inlined_call_operand.hbm [shape: f32[16,128], index: 11, kind: output, shape index: {1}]
  %12 = xla_tuple %s10, %s11
  %s13 = sld [smem:[#allocation0]]
  $region78: #{tpu_custom_call.1} parent=0
    _
  %s15 = ssub.s32 1, %s13
  %s16 = scalar_select 0, %s15, %s13
  $region1: #{tpu_custom_call.1} parent=0
    #allocation2 [shape = 'u8[8192]{0}', space=vmem, size = 0x2000, scoped, tag = 'input window, operand 0, single buffered']
    #allocation3 [shape = 's32[1]{0}', space=sflag, size = 0x4, scoped, tag = 'scoped memory for tpu_custom_call.1']
    #allocation4 [shape = 's32[1]{0}', space=sflag, size = 0x4, scoped, tag = 'scoped memory for tpu_custom_call.1']
    #allocation5 [shape = 'u8[32768]{0}', space=vmem, size = 0x8000, scoped, tag = 'input window, operand 1, single buffered']
    #allocation6 [shape = 's32[1]{0}', space=sflag, size = 0x4, scoped, tag = 'scoped memory for tpu_custom_call.1']
    #allocation7 [shape = 'u8[32768]{0}', space=vmem, size = 0x8000, scoped, tag = 'input window, operand 3, single buffered']
    #allocation8 [shape = 'u8[32768]{0}', space=vmem, size = 0x8000, scoped, tag = 'input window, operand 6, single buffered']
    #allocation9 [shape = 's32[1]{0}', space=sflag, size = 0x4, scoped, tag = 'scoped memory for tpu_custom_call.1']
    #allocation10 [shape = 'u8[32768]{0}', space=vmem, size = 0x8000, scoped, tag = 'input window, operand 8, single buffered']
    #allocation11 [shape = 'u8[8192]{0}', space=vmem, size = 0x2000, scoped, tag = 'output window, operand 0, single buffered']
    #allocation12 [shape = 'u8[8192]{0}', space=vmem, size = 0x2000, scoped, tag = 'output window, operand 1, single buffered']
    #allocation13 [shape = 's32[1]{0}', space=sflag, size = 0x4, scoped, tag = 'scoped memory for tpu_custom_call.1']
    %17 = vsyncpa [#allocation3], 0
    %18 = vsyncpa [#allocation6], 0
    %19 = vsyncpa [#allocation9], 0
    %20 = vsyncpa [#allocation4], 0
    %21 = vsyncpa [#allocation13], 0
    // Predicated region
    $region2: #{tpu_custom_call.1} parent=1 // pred_check
      _
    $region3: #{tpu_custom_call.1} parent=1 // pred_check_branch
      %23 = sbr.rel (0) target = $region5
    $region4: #{tpu_custom_call.1} parent=1 // pred_region
      %s25 = ssub.s32 256, 256
      %26 = vsyncadd [#allocation3], %s25
      %s27 = sshll.u32 [#allocation2], 4
      %s28 = int_to_ptr.vmem [resolvable:$true] %s27
      %33 = dma.hbm_to_vmem [thread:$0]  %s0, 256, %s28, [#allocation3], 128, 128, 8
    $region5: #{tpu_custom_call.1} parent=1 // pred_fallthru
      _
    // Predicated region
    $region6: #{tpu_custom_call.1} parent=1 // pred_check
      _
    $region7: #{tpu_custom_call.1} parent=1 // pred_check_branch
      %35 = sbr.rel (0) target = $region9
    $region8: #{tpu_custom_call.1} parent=1 // pred_region
      %s37 = ssub.s32 1024, 1024
      %38 = vsyncadd [#allocation6], %s37
      %s39 = sshll.u32 [#allocation5], 4
      %s40 = int_to_ptr.vmem [resolvable:$true] %s39
      %45 = dma.hbm_to_vmem [thread:$0]  %s1, 1024, %s40, [#allocation6], 64, 64, 4
    $region9: #{tpu_custom_call.1} parent=1 // pred_fallthru
      _
    // Predicated region
    $region10: #{tpu_custom_call.1} parent=1 // pred_check
      _
    $region11: #{tpu_custom_call.1} parent=1 // pred_check_branch
      %47 = sbr.rel (0) target = $region13
    $region12: #{tpu_custom_call.1} parent=1 // pred_region
      _
    $region13: #{tpu_custom_call.1} parent=1 // pred_fallthru
      _
    // Predicated region
    $region14: #{tpu_custom_call.1} parent=1 // pred_check
      _
    $region15: #{tpu_custom_call.1} parent=1 // pred_check_branch
      %49 = sbr.rel (0) target = $region17
    $region16: #{tpu_custom_call.1} parent=1 // pred_region
      %s51 = ssub.s32 1024, 1024
      %52 = vsyncadd [#allocation6], %s51
      %s53 = sshll.u32 [#allocation7], 4
      %s54 = int_to_ptr.vmem [resolvable:$true] %s53
      %59 = dma.hbm_to_vmem [thread:$0]  %s3, 1024, %s54, [#allocation6], 64, 64, 4
    $region17: #{tpu_custom_call.1} parent=1 // pred_fallthru
      _
    // Predicated region
    $region18: #{tpu_custom_call.1} parent=1 // pred_check
      _
    $region19: #{tpu_custom_call.1} parent=1 // pred_check_branch
      %61 = sbr.rel (0) target = $region21
    $region20: #{tpu_custom_call.1} parent=1 // pred_region
      _
    $region21: #{tpu_custom_call.1} parent=1 // pred_fallthru
      _
    // Predicated region
    $region22: #{tpu_custom_call.1} parent=1 // pred_check
      _
    $region23: #{tpu_custom_call.1} parent=1 // pred_check_branch
      %63 = sbr.rel (0) target = $region25
    $region24: #{tpu_custom_call.1} parent=1 // pred_region
      _
    $region25: #{tpu_custom_call.1} parent=1 // pred_fallthru
      _
    // Predicated region
    $region26: #{tpu_custom_call.1} parent=1 // pred_check
      _
    $region27: #{tpu_custom_call.1} parent=1 // pred_check_branch
      %65 = sbr.rel (0) target = $region29
    $region28: #{tpu_custom_call.1} parent=1 // pred_region
      %s67 = ssub.s32 1024, 1024
      %68 = vsyncadd [#allocation9], %s67
      %s69 = sshll.u32 [#allocation8], 4
      %s70 = int_to_ptr.vmem [resolvable:$true] %s69
      %75 = dma.hbm_to_vmem [thread:$0]  %s6, 1024, %s70, [#allocation9], 64, 64, 4
    $region29: #{tpu_custom_call.1} parent=1 // pred_fallthru
      _
    // Predicated region
    $region30: #{tpu_custom_call.1} parent=1 // pred_check
      _
    $region31: #{tpu_custom_call.1} parent=1 // pred_check_branch
      %77 = sbr.rel (0) target = $region33
    $region32: #{tpu_custom_call.1} parent=1 // pred_region
      _
    $region33: #{tpu_custom_call.1} parent=1 // pred_fallthru
      _
    // Predicated region
    $region34: #{tpu_custom_call.1} parent=1 // pred_check
      _
    $region35: #{tpu_custom_call.1} parent=1 // pred_check_branch
      %79 = sbr.rel (0) target = $region37
    $region36: #{tpu_custom_call.1} parent=1 // pred_region
      %s81 = ssub.s32 1024, 1024
      %82 = vsyncadd [#allocation9], %s81
      %s83 = sshll.u32 [#allocation10], 4
      %s84 = int_to_ptr.vmem [resolvable:$true] %s83
      %89 = dma.hbm_to_vmem [thread:$0]  %s8, 1024, %s84, [#allocation9], 64, 64, 4
    $region37: #{tpu_custom_call.1} parent=1 // pred_fallthru
      _
    // Predicated region
    $region38: #{tpu_custom_call.1} parent=1 // pred_check
      _
    $region39: #{tpu_custom_call.1} parent=1 // pred_check_branch
      %91 = sbr.rel (0) target = $region41
    $region40: #{tpu_custom_call.1} parent=1 // pred_region
      _
    $region41: #{tpu_custom_call.1} parent=1 // pred_fallthru
      _
    // Predicated region
    $region42: #{tpu_custom_call.1} parent=1 // pred_check
      _
    $region43: #{tpu_custom_call.1} parent=1 // pred_check_branch
      %93 = sbr.rel (0) target = $region45
    $region44: #{tpu_custom_call.1} parent=1 // pred_region
      %94 = dma.done [#allocation3], 256
    $region45: #{tpu_custom_call.1} parent=1 // pred_fallthru
      _
    // Predicated region
    $region46: #{tpu_custom_call.1} parent=1 // pred_check
      _
    $region47: #{tpu_custom_call.1} parent=1 // pred_check_branch
      %96 = sbr.rel (0) target = $region49
    $region48: #{tpu_custom_call.1} parent=1 // pred_region
      %97 = dma.done [#allocation6], 1024
    $region49: #{tpu_custom_call.1} parent=1 // pred_fallthru
      _
    // Predicated region
    $region50: #{tpu_custom_call.1} parent=1 // pred_check
      _
    $region51: #{tpu_custom_call.1} parent=1 // pred_check_branch
      %99 = sbr.rel (0) target = $region53
    $region52: #{tpu_custom_call.1} parent=1 // pred_region
      %100 = dma.done [#allocation6], 1024
    $region53: #{tpu_custom_call.1} parent=1 // pred_fallthru
      _
    // Predicated region
    $region54: #{tpu_custom_call.1} parent=1 // pred_check
      _
    $region55: #{tpu_custom_call.1} parent=1 // pred_check_branch
      %102 = sbr.rel (0) target = $region57
    $region56: #{tpu_custom_call.1} parent=1 // pred_region
      %103 = dma.done [#allocation9], 1024
    $region57: #{tpu_custom_call.1} parent=1 // pred_fallthru
      _
    // Predicated region
    $region58: #{tpu_custom_call.1} parent=1 // pred_check
      _
    $region59: #{tpu_custom_call.1} parent=1 // pred_check_branch
      %105 = sbr.rel (0) target = $region61
    $region60: #{tpu_custom_call.1} parent=1 // pred_region
      %106 = dma.done [#allocation9], 1024
    $region61: #{tpu_custom_call.1} parent=1 // pred_fallthru
      _
    %v108 = vld [vmem:[#allocation2] sm:$0xff]
    %v109 = vld [vmem:[#allocation2 + $0x8] sm:$0xff]
    %v110 = vpack.c.bf16 %v109, %v108
    %v111 = vld [vmem:[#allocation5] sm:$0xf]
    %v112 = vld [vmem:[#allocation5 + $0x4] sm:$0xf]
    %v113 = vld [vmem:[#allocation5 + $0x8] sm:$0xf]
    %v114 = vld [vmem:[#allocation5 + $0xc] sm:$0xf]
    %v115 = vld [vmem:[#allocation5 + $0x10] sm:$0xf]
    %v116 = vld [vmem:[#allocation5 + $0x14] sm:$0xf]
    %v117 = vld [vmem:[#allocation5 + $0x18] sm:$0xf]
    %v118 = vld [vmem:[#allocation5 + $0x1c] sm:$0xf]
    %v119 = vld [vmem:[#allocation5 + $0x20] sm:$0xf]
    %v120 = vld [vmem:[#allocation5 + $0x24] sm:$0xf]
    %v121 = vld [vmem:[#allocation5 + $0x28] sm:$0xf]
    %v122 = vld [vmem:[#allocation5 + $0x2c] sm:$0xf]
    %v123 = vld [vmem:[#allocation5 + $0x30] sm:$0xf]
    %v124 = vld [vmem:[#allocation5 + $0x34] sm:$0xf]
    %v125 = vld [vmem:[#allocation5 + $0x38] sm:$0xf]
    %v126 = vld [vmem:[#allocation5 + $0x3c] sm:$0xf]
    %v127 = vld [vmem:[%s2] sm:$0x1]
    %v129 = vlaneseq
    %v130 = vshrl.u32 %v129, 7
    %v131 = vsub.s32 0, %v130
    %v132 = vrot.slane %v127, %v131
    %v150 = vunpack.c.l.b16 %v111
    %v151 = vunpack.c.l.b16 %v112
    %v152 = vunpack.c.l.b16 %v113
    %v153 = vunpack.c.l.b16 %v114
    %v154 = vunpack.c.l.b16 %v115
    %v155 = vunpack.c.l.b16 %v116
    %v156 = vunpack.c.l.b16 %v117
    %v157 = vunpack.c.l.b16 %v118
    %v158 = vunpack.c.l.b16 %v119
    %v159 = vunpack.c.l.b16 %v120
    %v160 = vunpack.c.l.b16 %v121
    %v161 = vunpack.c.l.b16 %v122
    %v162 = vunpack.c.l.b16 %v123
    %v163 = vunpack.c.l.b16 %v124
    %v164 = vunpack.c.l.b16 %v125
    %v165 = vunpack.c.l.b16 %v126
    %v166 = vpack.c.b16 %v151, %v150
    %v167 = vpack.c.b16 %v153, %v152
    %v168 = vpack.c.b16 %v155, %v154
    %v169 = vpack.c.b16 %v157, %v156
    %v170 = vpack.c.b16 %v159, %v158
    %v171 = vpack.c.b16 %v161, %v160
    %v172 = vpack.c.b16 %v163, %v162
    %v173 = vpack.c.b16 %v165, %v164
    %182 = vmatprep.subr.bf16.mxu0 0
    %183 = vmatpush1.bf16.msra.mxu0 %v166
    %184 = vmatprep.subr.bf16.mxu0 0
    %185 = vmatpush1.bf16.msra.mxu0 %v167
    %186 = vmatprep.subr.bf16.mxu0 0
    %187 = vmatpush1.bf16.msra.mxu0 %v168
    %188 = vmatprep.subr.bf16.mxu0 0
    %189 = vmatpush1.bf16.msra.mxu0 %v169
    %190 = vmatprep.subr.bf16.mxu0 0
    %191 = vmatpush1.bf16.msra.mxu0 %v170
    %192 = vmatprep.subr.bf16.mxu0 0
    %193 = vmatpush1.bf16.msra.mxu0 %v171
    %194 = vmatprep.subr.bf16.mxu0 0
    %195 = vmatpush1.bf16.msra.mxu0 %v172
    %196 = vmatprep.subr.bf16.mxu0 0
    %197 = vmatpush1.bf16.msra.mxu0 %v173
    %198 = vmatprep.subr.bf16.mxu0 0
    %199 = vmatpush1.bf16.msra.mxu0 0
    %200 = vmatprep.subr.bf16.mxu0 0
    %201 = vmatpush1.bf16.msra.mxu0 0
    %202 = vmatprep.subr.bf16.mxu0 0
    %203 = vmatpush1.bf16.msra.mxu0 0
    %204 = vmatprep.subr.bf16.mxu0 0
    %205 = vmatpush1.bf16.msra.mxu0 0
    %206 = vmatprep.subr.bf16.mxu0 0
    %207 = vmatpush1.bf16.msra.mxu0 0
    %208 = vmatprep.subr.bf16.mxu0 0
    %209 = vmatpush1.bf16.msra.mxu0 0
    %210 = vmatprep.subr.bf16.mxu0 0
    %211 = vmatpush1.bf16.msra.mxu0 0
    %212 = vmatprep.subr.bf16.mxu0 0
    %213 = vmatpush1.bf16.msra.mxu0 0
    %214 = vmatprep.mubr.bf16.mxu0 0
    %215 = vmatmul.mubr.bf16.gmra.mrb[0].mxu0 %v110
    %v216 = vpop.f32.mrb[0].mxu0
    %v217 = vadd.f32 %v132, %v216
    %v218 = vpop.f32.mrb[0].mxu0
    %v219 = vpop.f32.mrb[0].mxu0
    %v220 = vadd.f32 %v132, %v219
    %v221 = vpop.f32.mrb[0].mxu0
    %222 = vdwg.mxu0
    %v223 = vmax.f32 %v217, 0.0
    %v224 = vmax.f32 %v220, 0.0
    %v225 = vpack.c.bf16 %v224, %v223
    %v226 = vld [vmem:[#allocation7] sm:$0xf]
    %v227 = vld [vmem:[#allocation7 + $0x4] sm:$0xf]
    %v228 = vld [vmem:[#allocation7 + $0x8] sm:$0xf]
    %v229 = vld [vmem:[#allocation7 + $0xc] sm:$0xf]
    %v230 = vld [vmem:[#allocation7 + $0x10] sm:$0xf]
    %v231 = vld [vmem:[#allocation7 + $0x14] sm:$0xf]
    %v232 = vld [vmem:[#allocation7 + $0x18] sm:$0xf]
    %v233 = vld [vmem:[#allocation7 + $0x1c] sm:$0xf]
    %v234 = vld [vmem:[#allocation7 + $0x20] sm:$0xf]
    %v235 = vld [vmem:[#allocation7 + $0x24] sm:$0xf]
    %v236 = vld [vmem:[#allocation7 + $0x28] sm:$0xf]
    %v237 = vld [vmem:[#allocation7 + $0x2c] sm:$0xf]
    %v238 = vld [vmem:[#allocation7 + $0x30] sm:$0xf]
    %v239 = vld [vmem:[#allocation7 + $0x34] sm:$0xf]
    %v240 = vld [vmem:[#allocation7 + $0x38] sm:$0xf]
    %v241 = vld [vmem:[#allocation7 + $0x3c] sm:$0xf]
    %v242 = vld [vmem:[%s4] sm:$0x1]
    %v244 = vlaneseq
    %v245 = vshrl.u32 %v244, 7
    %v246 = vsub.s32 0, %v245
    %v247 = vrot.slane %v242, %v246
    %v265 = vunpack.c.l.b16 %v226
    %v266 = vunpack.c.l.b16 %v227
    %v267 = vunpack.c.l.b16 %v228
    %v268 = vunpack.c.l.b16 %v229
    %v269 = vunpack.c.l.b16 %v230
    %v270 = vunpack.c.l.b16 %v231
    %v271 = vunpack.c.l.b16 %v232
    %v272 = vunpack.c.l.b16 %v233
    %v273 = vunpack.c.l.b16 %v234
    %v274 = vunpack.c.l.b16 %v235
    %v275 = vunpack.c.l.b16 %v236
    %v276 = vunpack.c.l.b16 %v237
    %v277 = vunpack.c.l.b16 %v238
    %v278 = vunpack.c.l.b16 %v239
    %v279 = vunpack.c.l.b16 %v240
    %v280 = vunpack.c.l.b16 %v241
    %v281 = vpack.c.b16 %v266, %v265
    %v282 = vpack.c.b16 %v268, %v267
    %v283 = vpack.c.b16 %v270, %v269
    %v284 = vpack.c.b16 %v272, %v271
    %v285 = vpack.c.b16 %v274, %v273
    %v286 = vpack.c.b16 %v276, %v275
    %v287 = vpack.c.b16 %v278, %v277
    %v288 = vpack.c.b16 %v280, %v279
    %297 = vmatprep.subr.bf16.mxu0 0
    %298 = vmatpush1.bf16.msra.mxu0 %v281
    %299 = vmatprep.subr.bf16.mxu0 0
    %300 = vmatpush1.bf16.msra.mxu0 %v282
    %301 = vmatprep.subr.bf16.mxu0 0
    %302 = vmatpush1.bf16.msra.mxu0 %v283
    %303 = vmatprep.subr.bf16.mxu0 0
    %304 = vmatpush1.bf16.msra.mxu0 %v284
    %305 = vmatprep.subr.bf16.mxu0 0
    %306 = vmatpush1.bf16.msra.mxu0 %v285
    %307 = vmatprep.subr.bf16.mxu0 0
    %308 = vmatpush1.bf16.msra.mxu0 %v286
    %309 = vmatprep.subr.bf16.mxu0 0
    %310 = vmatpush1.bf16.msra.mxu0 %v287
    %311 = vmatprep.subr.bf16.mxu0 0
    %312 = vmatpush1.bf16.msra.mxu0 %v288
    %313 = vmatprep.subr.bf16.mxu0 0
    %314 = vmatpush1.bf16.msra.mxu0 0
    %315 = vmatprep.subr.bf16.mxu0 0
    %316 = vmatpush1.bf16.msra.mxu0 0
    %317 = vmatprep.subr.bf16.mxu0 0
    %318 = vmatpush1.bf16.msra.mxu0 0
    %319 = vmatprep.subr.bf16.mxu0 0
    %320 = vmatpush1.bf16.msra.mxu0 0
    %321 = vmatprep.subr.bf16.mxu0 0
    %322 = vmatpush1.bf16.msra.mxu0 0
    %323 = vmatprep.subr.bf16.mxu0 0
    %324 = vmatpush1.bf16.msra.mxu0 0
    %325 = vmatprep.subr.bf16.mxu0 0
    %326 = vmatpush1.bf16.msra.mxu0 0
    %327 = vmatprep.subr.bf16.mxu0 0
    %328 = vmatpush1.bf16.msra.mxu0 0
    %329 = vmatprep.mubr.bf16.mxu0 0
    %330 = vmatmul.mubr.bf16.gmra.mrb[0].mxu0 %v225
    %v331 = vpop.f32.mrb[0].mxu0
    %v332 = vadd.f32 %v247, %v331
    %v333 = vpop.f32.mrb[0].mxu0
    %v334 = vpop.f32.mrb[0].mxu0
    %v335 = vadd.f32 %v247, %v334
    %v336 = vpop.f32.mrb[0].mxu0
    %337 = vdwg.mxu0
    %v338 = vmul.f32 %v332, %v332
    %v339 = vmul.f32 %v335, %v335
    %340 = vadd.xlane.f32.xlu0 %v338
    %v341 = vpop.xlane.xlu0 %340
    %342 = vadd.xlane.f32.xlu0 %v339
    %v343 = vpop.xlane.xlu0 %342
    %v344 = vmax.f32 %v341, 1e-24
    %v345 = vmax.f32 %v343, 1e-24
    %v346 = vrsqrt.pop %v344
    %v347 = vrsqrt.pop %v345
    %v348 = vmul.f32 %v332, %v346
    %v349 = vmul.f32 %v335, %v347
    %350 = vst [vmem:[#allocation11] sm:$0xff] %v348
    %351 = vst [vmem:[#allocation11 + $0x8] sm:$0xff] %v349
    %v352 = vld [vmem:[%s5] sm:$0xff]
    %v353 = vld [vmem:[%s5 + $0x8] sm:$0xff]
    %v354 = vpack.c.bf16 %v353, %v352
    %v355 = vld [vmem:[#allocation8] sm:$0xf]
    %v356 = vld [vmem:[#allocation8 + $0x4] sm:$0xf]
    %v357 = vld [vmem:[#allocation8 + $0x8] sm:$0xf]
    %v358 = vld [vmem:[#allocation8 + $0xc] sm:$0xf]
    %v359 = vld [vmem:[#allocation8 + $0x10] sm:$0xf]
    %v360 = vld [vmem:[#allocation8 + $0x14] sm:$0xf]
    %v361 = vld [vmem:[#allocation8 + $0x18] sm:$0xf]
    %v362 = vld [vmem:[#allocation8 + $0x1c] sm:$0xf]
    %v363 = vld [vmem:[#allocation8 + $0x20] sm:$0xf]
    %v364 = vld [vmem:[#allocation8 + $0x24] sm:$0xf]
    %v365 = vld [vmem:[#allocation8 + $0x28] sm:$0xf]
    %v366 = vld [vmem:[#allocation8 + $0x2c] sm:$0xf]
    %v367 = vld [vmem:[#allocation8 + $0x30] sm:$0xf]
    %v368 = vld [vmem:[#allocation8 + $0x34] sm:$0xf]
    %v369 = vld [vmem:[#allocation8 + $0x38] sm:$0xf]
    %v370 = vld [vmem:[#allocation8 + $0x3c] sm:$0xf]
    %v371 = vld [vmem:[%s7] sm:$0x1]
    %v373 = vlaneseq
    %v374 = vshrl.u32 %v373, 7
    %v375 = vsub.s32 0, %v374
    %v376 = vrot.slane %v371, %v375
    %v394 = vunpack.c.l.b16 %v355
    %v395 = vunpack.c.l.b16 %v356
    %v396 = vunpack.c.l.b16 %v357
    %v397 = vunpack.c.l.b16 %v358
    %v398 = vunpack.c.l.b16 %v359
    %v399 = vunpack.c.l.b16 %v360
    %v400 = vunpack.c.l.b16 %v361
    %v401 = vunpack.c.l.b16 %v362
    %v402 = vunpack.c.l.b16 %v363
    %v403 = vunpack.c.l.b16 %v364
    %v404 = vunpack.c.l.b16 %v365
    %v405 = vunpack.c.l.b16 %v366
    %v406 = vunpack.c.l.b16 %v367
    %v407 = vunpack.c.l.b16 %v368
    %v408 = vunpack.c.l.b16 %v369
    %v409 = vunpack.c.l.b16 %v370
    %v410 = vpack.c.b16 %v395, %v394
    %v411 = vpack.c.b16 %v397, %v396
    %v412 = vpack.c.b16 %v399, %v398
    %v413 = vpack.c.b16 %v401, %v400
    %v414 = vpack.c.b16 %v403, %v402
    %v415 = vpack.c.b16 %v405, %v404
    %v416 = vpack.c.b16 %v407, %v406
    %v417 = vpack.c.b16 %v409, %v408
    %426 = vmatprep.subr.bf16.mxu0 0
    %427 = vmatpush1.bf16.msra.mxu0 %v410
    %428 = vmatprep.subr.bf16.mxu0 0
    %429 = vmatpush1.bf16.msra.mxu0 %v411
    %430 = vmatprep.subr.bf16.mxu0 0
    %431 = vmatpush1.bf16.msra.mxu0 %v412
    %432 = vmatprep.subr.bf16.mxu0 0
    %433 = vmatpush1.bf16.msra.mxu0 %v413
    %434 = vmatprep.subr.bf16.mxu0 0
    %435 = vmatpush1.bf16.msra.mxu0 %v414
    %436 = vmatprep.subr.bf16.mxu0 0
    %437 = vmatpush1.bf16.msra.mxu0 %v415
    %438 = vmatprep.subr.bf16.mxu0 0
    %439 = vmatpush1.bf16.msra.mxu0 %v416
    %440 = vmatprep.subr.bf16.mxu0 0
    %441 = vmatpush1.bf16.msra.mxu0 %v417
    %442 = vmatprep.subr.bf16.mxu0 0
    %443 = vmatpush1.bf16.msra.mxu0 0
    %444 = vmatprep.subr.bf16.mxu0 0
    %445 = vmatpush1.bf16.msra.mxu0 0
    %446 = vmatprep.subr.bf16.mxu0 0
    %447 = vmatpush1.bf16.msra.mxu0 0
    %448 = vmatprep.subr.bf16.mxu0 0
    %449 = vmatpush1.bf16.msra.mxu0 0
    %450 = vmatprep.subr.bf16.mxu0 0
    %451 = vmatpush1.bf16.msra.mxu0 0
    %452 = vmatprep.subr.bf16.mxu0 0
    %453 = vmatpush1.bf16.msra.mxu0 0
    %454 = vmatprep.subr.bf16.mxu0 0
    %455 = vmatpush1.bf16.msra.mxu0 0
    %456 = vmatprep.subr.bf16.mxu0 0
    %457 = vmatpush1.bf16.msra.mxu0 0
    %458 = vmatprep.mubr.bf16.mxu0 0
    %459 = vmatmul.mubr.bf16.gmra.mrb[0].mxu0 %v354
    %v460 = vpop.f32.mrb[0].mxu0
    %v461 = vadd.f32 %v376, %v460
    %v462 = vpop.f32.mrb[0].mxu0
    %v463 = vpop.f32.mrb[0].mxu0
    %v464 = vadd.f32 %v376, %v463
    %v465 = vpop.f32.mrb[0].mxu0
    %466 = vdwg.mxu0
    %v467 = vmax.f32 %v461, 0.0
    %v468 = vmax.f32 %v464, 0.0
    %v469 = vpack.c.bf16 %v468, %v467
    %v470 = vld [vmem:[#allocation10] sm:$0xf]
    %v471 = vld [vmem:[#allocation10 + $0x4] sm:$0xf]
    %v472 = vld [vmem:[#allocation10 + $0x8] sm:$0xf]
    %v473 = vld [vmem:[#allocation10 + $0xc] sm:$0xf]
    %v474 = vld [vmem:[#allocation10 + $0x10] sm:$0xf]
    %v475 = vld [vmem:[#allocation10 + $0x14] sm:$0xf]
    %v476 = vld [vmem:[#allocation10 + $0x18] sm:$0xf]
    %v477 = vld [vmem:[#allocation10 + $0x1c] sm:$0xf]
    %v478 = vld [vmem:[#allocation10 + $0x20] sm:$0xf]
    %v479 = vld [vmem:[#allocation10 + $0x24] sm:$0xf]
    %v480 = vld [vmem:[#allocation10 + $0x28] sm:$0xf]
    %v481 = vld [vmem:[#allocation10 + $0x2c] sm:$0xf]
    %v482 = vld [vmem:[#allocation10 + $0x30] sm:$0xf]
    %v483 = vld [vmem:[#allocation10 + $0x34] sm:$0xf]
    %v484 = vld [vmem:[#allocation10 + $0x38] sm:$0xf]
    %v485 = vld [vmem:[#allocation10 + $0x3c] sm:$0xf]
    %v486 = vld [vmem:[%s9] sm:$0x1]
    %v488 = vlaneseq
    %v489 = vshrl.u32 %v488, 7
    %v490 = vsub.s32 0, %v489
    %v491 = vrot.slane %v486, %v490
    %v509 = vunpack.c.l.b16 %v470
    %v510 = vunpack.c.l.b16 %v471
    %v511 = vunpack.c.l.b16 %v472
    %v512 = vunpack.c.l.b16 %v473
    %v513 = vunpack.c.l.b16 %v474
    %v514 = vunpack.c.l.b16 %v475
    %v515 = vunpack.c.l.b16 %v476
    %v516 = vunpack.c.l.b16 %v477
    %v517 = vunpack.c.l.b16 %v478
    %v518 = vunpack.c.l.b16 %v479
    %v519 = vunpack.c.l.b16 %v480
    %v520 = vunpack.c.l.b16 %v481
    %v521 = vunpack.c.l.b16 %v482
    %v522 = vunpack.c.l.b16 %v483
    %v523 = vunpack.c.l.b16 %v484
    %v524 = vunpack.c.l.b16 %v485
    %v525 = vpack.c.b16 %v510, %v509
    %v526 = vpack.c.b16 %v512, %v511
    %v527 = vpack.c.b16 %v514, %v513
    %v528 = vpack.c.b16 %v516, %v515
    %v529 = vpack.c.b16 %v518, %v517
    %v530 = vpack.c.b16 %v520, %v519
    %v531 = vpack.c.b16 %v522, %v521
    %v532 = vpack.c.b16 %v524, %v523
    %541 = vmatprep.subr.bf16.mxu0 0
    %542 = vmatpush1.bf16.msra.mxu0 %v525
    %543 = vmatprep.subr.bf16.mxu0 0
    %544 = vmatpush1.bf16.msra.mxu0 %v526
    %545 = vmatprep.subr.bf16.mxu0 0
    %546 = vmatpush1.bf16.msra.mxu0 %v527
    %547 = vmatprep.subr.bf16.mxu0 0
    %548 = vmatpush1.bf16.msra.mxu0 %v528
    %549 = vmatprep.subr.bf16.mxu0 0
    %550 = vmatpush1.bf16.msra.mxu0 %v529
    %551 = vmatprep.subr.bf16.mxu0 0
    %552 = vmatpush1.bf16.msra.mxu0 %v530
    %553 = vmatprep.subr.bf16.mxu0 0
    %554 = vmatpush1.bf16.msra.mxu0 %v531
    %555 = vmatprep.subr.bf16.mxu0 0
    %556 = vmatpush1.bf16.msra.mxu0 %v532
    %557 = vmatprep.subr.bf16.mxu0 0
    %558 = vmatpush1.bf16.msra.mxu0 0
    %559 = vmatprep.subr.bf16.mxu0 0
    %560 = vmatpush1.bf16.msra.mxu0 0
    %561 = vmatprep.subr.bf16.mxu0 0
    %562 = vmatpush1.bf16.msra.mxu0 0
    %563 = vmatprep.subr.bf16.mxu0 0
    %564 = vmatpush1.bf16.msra.mxu0 0
    %565 = vmatprep.subr.bf16.mxu0 0
    %566 = vmatpush1.bf16.msra.mxu0 0
    %567 = vmatprep.subr.bf16.mxu0 0
    %568 = vmatpush1.bf16.msra.mxu0 0
    %569 = vmatprep.subr.bf16.mxu0 0
    %570 = vmatpush1.bf16.msra.mxu0 0
    %571 = vmatprep.subr.bf16.mxu0 0
    %572 = vmatpush1.bf16.msra.mxu0 0
    %573 = vmatprep.mubr.bf16.mxu0 0
    %574 = vmatmul.mubr.bf16.gmra.mrb[0].mxu0 %v469
    %v575 = vpop.f32.mrb[0].mxu0
    %v576 = vadd.f32 %v491, %v575
    %v577 = vpop.f32.mrb[0].mxu0
    %v578 = vpop.f32.mrb[0].mxu0
    %v579 = vadd.f32 %v491, %v578
    %v580 = vpop.f32.mrb[0].mxu0
    %581 = vdwg.mxu0
    %v582 = vmul.f32 %v576, %v576
    %v583 = vmul.f32 %v579, %v579
    %584 = vadd.xlane.f32.xlu0 %v582
    %v585 = vpop.xlane.xlu0 %584
    %586 = vadd.xlane.f32.xlu0 %v583
    %v587 = vpop.xlane.xlu0 %586
    %v588 = vmax.f32 %v585, 1e-24
    %v589 = vmax.f32 %v587, 1e-24
    %v590 = vrsqrt.pop %v588
    %v591 = vrsqrt.pop %v589
    %v592 = vmul.f32 %v576, %v590
    %v593 = vmul.f32 %v579, %v591
    %594 = vst [vmem:[#allocation12] sm:$0xff] %v592
    %595 = vst [vmem:[#allocation12 + $0x8] sm:$0xff] %v593
    // Predicated region
    $region62: #{tpu_custom_call.1} parent=1 // pred_check
      _
    $region63: #{tpu_custom_call.1} parent=1 // pred_check_branch
      %597 = sbr.rel (0) target = $region65
    $region64: #{tpu_custom_call.1} parent=1 // pred_region
      %s599 = ssub.s32 256, 256
      %600 = vsyncadd [#allocation4], %s599
      %s601 = sshll.u32 [#allocation11], 4
      %s602 = int_to_ptr.vmem [resolvable:$true] %s601
      %607 = dma.vmem_to_hbm [thread:$0]  %s602, 256, %s10, [#allocation4], 128, 128, 8
    $region65: #{tpu_custom_call.1} parent=1 // pred_fallthru
      _
    // Predicated region
    $region66: #{tpu_custom_call.1} parent=1 // pred_check
      _
    $region67: #{tpu_custom_call.1} parent=1 // pred_check_branch
      %609 = sbr.rel (0) target = $region69
    $region68: #{tpu_custom_call.1} parent=1 // pred_region
      %s611 = ssub.s32 256, 256
      %612 = vsyncadd [#allocation13], %s611
      %s613 = sshll.u32 [#allocation12], 4
      %s614 = int_to_ptr.vmem [resolvable:$true] %s613
      %619 = dma.vmem_to_hbm [thread:$0]  %s614, 256, %s11, [#allocation13], 128, 128, 8
    $region69: #{tpu_custom_call.1} parent=1 // pred_fallthru
      _
    // Predicated region
    $region70: #{tpu_custom_call.1} parent=1 // pred_check
      _
    $region71: #{tpu_custom_call.1} parent=1 // pred_check_branch
      %621 = sbr.rel (0) target = $region73
    $region72: #{tpu_custom_call.1} parent=1 // pred_region
      %622 = dma.done [#allocation4], 256
    $region73: #{tpu_custom_call.1} parent=1 // pred_fallthru
      _
    // Predicated region
    $region74: #{tpu_custom_call.1} parent=1 // pred_check
      _
    $region75: #{tpu_custom_call.1} parent=1 // pred_check_branch
      %624 = sbr.rel (0) target = $region77
    $region76: #{tpu_custom_call.1} parent=1 // pred_region
      %625 = dma.done [#allocation13], 256
    $region77: #{tpu_custom_call.1} parent=1 // pred_fallthru
      _
    %626 = vsyncpa [#allocation3], 1
    %627 = vsyncpa [#allocation6], 1
    %628 = vsyncpa [#allocation9], 1
    %629 = vsyncpa [#allocation4], 1
    %630 = vsyncpa [#allocation13], 1

// kernel: tpu_custom_call.1
$region0: #{tpu_custom_call.1}
  #allocation0 [shape = 'u32[]', space=smem, size = 0x4, offset = 0x4, fixed_abs, tag = 'smem constant byte address 0x4 - core index']
  #allocation1 [shape = 'u32[144,128]{1,0:T(1,128)}', space=vmem, size = 0x12000, scoped, tag = 'internal scratch']
  %s0 = inlined_call_operand.hbm [shape: f32[16,128], index: 0, kind: input, shape index: {}]
  %s1 = inlined_call_operand.hbm [shape: bf16[128,128], index: 1, kind: input, shape index: {}]
  %s2 = inlined_call_operand.vmem [shape: f32[1,128], index: 2, kind: input, shape index: {}]
  %s3 = inlined_call_operand.hbm [shape: bf16[128,128], index: 3, kind: input, shape index: {}]
  %s4 = inlined_call_operand.vmem [shape: f32[1,128], index: 4, kind: input, shape index: {}]
  %s5 = inlined_call_operand.vmem [shape: f32[16,128], index: 5, kind: input, shape index: {}]
  %s6 = inlined_call_operand.hbm [shape: bf16[128,128], index: 6, kind: input, shape index: {}]
  %s7 = inlined_call_operand.vmem [shape: f32[1,128], index: 7, kind: input, shape index: {}]
  %s8 = inlined_call_operand.hbm [shape: bf16[128,128], index: 8, kind: input, shape index: {}]
  %s9 = inlined_call_operand.vmem [shape: f32[1,128], index: 9, kind: input, shape index: {}]
  %s10 = inlined_call_operand.hbm [shape: f32[16,128], index: 10, kind: output, shape index: {0}]
  %s11 = inlined_call_operand.hbm [shape: f32[16,128], index: 11, kind: output, shape index: {1}]
  %12 = xla_tuple %s10, %s11
  %s13 = sld [smem:[#allocation0]]
  $region78: #{tpu_custom_call.1} parent=0
    _
  %s15 = ssub.s32 1, %s13
  %s16 = scalar_select 0, %s15, %s13
  $region1: #{tpu_custom_call.1} parent=0
    #allocation2 [shape = 'u8[8192]{0}', space=vmem, size = 0x2000, scoped, tag = 'input window, operand 0, single buffered']
    #allocation3 [shape = 's32[1]{0}', space=sflag, size = 0x4, scoped, tag = 'scoped memory for tpu_custom_call.1']
    #allocation4 [shape = 's32[1]{0}', space=sflag, size = 0x4, scoped, tag = 'scoped memory for tpu_custom_call.1']
    #allocation5 [shape = 'u8[32768]{0}', space=vmem, size = 0x8000, scoped, tag = 'input window, operand 1, single buffered']
    #allocation6 [shape = 's32[1]{0}', space=sflag, size = 0x4, scoped, tag = 'scoped memory for tpu_custom_call.1']
    #allocation7 [shape = 'u8[32768]{0}', space=vmem, size = 0x8000, scoped, tag = 'input window, operand 3, single buffered']
    #allocation8 [shape = 'u8[32768]{0}', space=vmem, size = 0x8000, scoped, tag = 'input window, operand 6, single buffered']
    #allocation9 [shape = 's32[1]{0}', space=sflag, size = 0x4, scoped, tag = 'scoped memory for tpu_custom_call.1']
    #allocation10 [shape = 'u8[32768]{0}', space=vmem, size = 0x8000, scoped, tag = 'input window, operand 8, single buffered']
    #allocation11 [shape = 'u8[8192]{0}', space=vmem, size = 0x2000, scoped, tag = 'output window, operand 0, single buffered']
    #allocation12 [shape = 'u8[8192]{0}', space=vmem, size = 0x2000, scoped, tag = 'output window, operand 1, single buffered']
    #allocation13 [shape = 's32[1]{0}', space=sflag, size = 0x4, scoped, tag = 'scoped memory for tpu_custom_call.1']
    %17 = vsyncpa [#allocation3], 0
    %18 = vsyncpa [#allocation6], 0
    %19 = vsyncpa [#allocation9], 0
    %20 = vsyncpa [#allocation4], 0
    %21 = vsyncpa [#allocation13], 0
    // Predicated region
    $region2: #{tpu_custom_call.1} parent=1 // pred_check
      _
    $region3: #{tpu_custom_call.1} parent=1 // pred_check_branch
      %23 = sbr.rel (0) target = $region5
    $region4: #{tpu_custom_call.1} parent=1 // pred_region
      %s25 = ssub.s32 256, 256
      %26 = vsyncadd [#allocation3], %s25
      %s27 = sshll.u32 [#allocation2], 4
      %s28 = int_to_ptr.vmem [resolvable:$true] %s27
      %33 = dma.hbm_to_vmem [thread:$0]  %s0, 256, %s28, [#allocation3], 128, 128, 8
    $region5: #{tpu_custom_call.1} parent=1 // pred_fallthru
      _
    // Predicated region
    $region6: #{tpu_custom_call.1} parent=1 // pred_check
      _
    $region7: #{tpu_custom_call.1} parent=1 // pred_check_branch
      %35 = sbr.rel (0) target = $region9
    $region8: #{tpu_custom_call.1} parent=1 // pred_region
      %s37 = ssub.s32 1024, 1024
      %38 = vsyncadd [#allocation6], %s37
      %s39 = sshll.u32 [#allocation5], 4
      %s40 = int_to_ptr.vmem [resolvable:$true] %s39
      %45 = dma.hbm_to_vmem [thread:$0]  %s1, 1024, %s40, [#allocation6], 64, 64, 4
    $region9: #{tpu_custom_call.1} parent=1 // pred_fallthru
      _
    // Predicated region
    $region10: #{tpu_custom_call.1} parent=1 // pred_check
      _
    $region11: #{tpu_custom_call.1} parent=1 // pred_check_branch
      %47 = sbr.rel (0) target = $region13
    $region12: #{tpu_custom_call.1} parent=1 // pred_region
      _
    $region13: #{tpu_custom_call.1} parent=1 // pred_fallthru
      _
    // Predicated region
    $region14: #{tpu_custom_call.1} parent=1 // pred_check
      _
    $region15: #{tpu_custom_call.1} parent=1 // pred_check_branch
      %49 = sbr.rel (0) target = $region17
    $region16: #{tpu_custom_call.1} parent=1 // pred_region
      %s51 = ssub.s32 1024, 1024
      %52 = vsyncadd [#allocation6], %s51
      %s53 = sshll.u32 [#allocation7], 4
      %s54 = int_to_ptr.vmem [resolvable:$true] %s53
      %59 = dma.hbm_to_vmem [thread:$0]  %s3, 1024, %s54, [#allocation6], 64, 64, 4
    $region17: #{tpu_custom_call.1} parent=1 // pred_fallthru
      _
    // Predicated region
    $region18: #{tpu_custom_call.1} parent=1 // pred_check
      _
    $region19: #{tpu_custom_call.1} parent=1 // pred_check_branch
      %61 = sbr.rel (0) target = $region21
    $region20: #{tpu_custom_call.1} parent=1 // pred_region
      _
    $region21: #{tpu_custom_call.1} parent=1 // pred_fallthru
      _
    // Predicated region
    $region22: #{tpu_custom_call.1} parent=1 // pred_check
      _
    $region23: #{tpu_custom_call.1} parent=1 // pred_check_branch
      %63 = sbr.rel (0) target = $region25
    $region24: #{tpu_custom_call.1} parent=1 // pred_region
      _
    $region25: #{tpu_custom_call.1} parent=1 // pred_fallthru
      _
    // Predicated region
    $region26: #{tpu_custom_call.1} parent=1 // pred_check
      _
    $region27: #{tpu_custom_call.1} parent=1 // pred_check_branch
      %65 = sbr.rel (0) target = $region29
    $region28: #{tpu_custom_call.1} parent=1 // pred_region
      %s67 = ssub.s32 1024, 1024
      %68 = vsyncadd [#allocation9], %s67
      %s69 = sshll.u32 [#allocation8], 4
      %s70 = int_to_ptr.vmem [resolvable:$true] %s69
      %75 = dma.hbm_to_vmem [thread:$0]  %s6, 1024, %s70, [#allocation9], 64, 64, 4
    $region29: #{tpu_custom_call.1} parent=1 // pred_fallthru
      _
    // Predicated region
    $region30: #{tpu_custom_call.1} parent=1 // pred_check
      _
    $region31: #{tpu_custom_call.1} parent=1 // pred_check_branch
      %77 = sbr.rel (0) target = $region33
    $region32: #{tpu_custom_call.1} parent=1 // pred_region
      _
    $region33: #{tpu_custom_call.1} parent=1 // pred_fallthru
      _
    // Predicated region
    $region34: #{tpu_custom_call.1} parent=1 // pred_check
      _
    $region35: #{tpu_custom_call.1} parent=1 // pred_check_branch
      %79 = sbr.rel (0) target = $region37
    $region36: #{tpu_custom_call.1} parent=1 // pred_region
      %s81 = ssub.s32 1024, 1024
      %82 = vsyncadd [#allocation9], %s81
      %s83 = sshll.u32 [#allocation10], 4
      %s84 = int_to_ptr.vmem [resolvable:$true] %s83
      %89 = dma.hbm_to_vmem [thread:$0]  %s8, 1024, %s84, [#allocation9], 64, 64, 4
    $region37: #{tpu_custom_call.1} parent=1 // pred_fallthru
      _
    // Predicated region
    $region38: #{tpu_custom_call.1} parent=1 // pred_check
      _
    $region39: #{tpu_custom_call.1} parent=1 // pred_check_branch
      %91 = sbr.rel (0) target = $region41
    $region40: #{tpu_custom_call.1} parent=1 // pred_region
      _
    $region41: #{tpu_custom_call.1} parent=1 // pred_fallthru
      _
    // Predicated region
    $region42: #{tpu_custom_call.1} parent=1 // pred_check
      _
    $region43: #{tpu_custom_call.1} parent=1 // pred_check_branch
      %93 = sbr.rel (0) target = $region45
    $region44: #{tpu_custom_call.1} parent=1 // pred_region
      %94 = dma.done [#allocation3], 256
    $region45: #{tpu_custom_call.1} parent=1 // pred_fallthru
      _
    // Predicated region
    $region46: #{tpu_custom_call.1} parent=1 // pred_check
      _
    $region47: #{tpu_custom_call.1} parent=1 // pred_check_branch
      %96 = sbr.rel (0) target = $region49
    $region48: #{tpu_custom_call.1} parent=1 // pred_region
      %97 = dma.done [#allocation6], 1024
    $region49: #{tpu_custom_call.1} parent=1 // pred_fallthru
      _
    // Predicated region
    $region50: #{tpu_custom_call.1} parent=1 // pred_check
      _
    $region51: #{tpu_custom_call.1} parent=1 // pred_check_branch
      %99 = sbr.rel (0) target = $region53
    $region52: #{tpu_custom_call.1} parent=1 // pred_region
      %100 = dma.done [#allocation6], 1024
    $region53: #{tpu_custom_call.1} parent=1 // pred_fallthru
      _
    // Predicated region
    $region54: #{tpu_custom_call.1} parent=1 // pred_check
      _
    $region55: #{tpu_custom_call.1} parent=1 // pred_check_branch
      %102 = sbr.rel (0) target = $region57
    $region56: #{tpu_custom_call.1} parent=1 // pred_region
      %103 = dma.done [#allocation9], 1024
    $region57: #{tpu_custom_call.1} parent=1 // pred_fallthru
      _
    // Predicated region
    $region58: #{tpu_custom_call.1} parent=1 // pred_check
      _
    $region59: #{tpu_custom_call.1} parent=1 // pred_check_branch
      %105 = sbr.rel (0) target = $region61
    $region60: #{tpu_custom_call.1} parent=1 // pred_region
      %106 = dma.done [#allocation9], 1024
    $region61: #{tpu_custom_call.1} parent=1 // pred_fallthru
      _
    %v108 = vld [vmem:[#allocation2] sm:$0xff]
    %v109 = vld [vmem:[#allocation2 + $0x8] sm:$0xff]
    %v110 = vpack.c.bf16 %v109, %v108
    %v111 = vld [vmem:[#allocation5] sm:$0xf]
    %v112 = vld [vmem:[#allocation5 + $0x4] sm:$0xf]
    %v113 = vld [vmem:[#allocation5 + $0x8] sm:$0xf]
    %v114 = vld [vmem:[#allocation5 + $0xc] sm:$0xf]
    %v115 = vld [vmem:[#allocation5 + $0x10] sm:$0xf]
    %v116 = vld [vmem:[#allocation5 + $0x14] sm:$0xf]
    %v117 = vld [vmem:[#allocation5 + $0x18] sm:$0xf]
    %v118 = vld [vmem:[#allocation5 + $0x1c] sm:$0xf]
    %v119 = vld [vmem:[#allocation5 + $0x20] sm:$0xf]
    %v120 = vld [vmem:[#allocation5 + $0x24] sm:$0xf]
    %v121 = vld [vmem:[#allocation5 + $0x28] sm:$0xf]
    %v122 = vld [vmem:[#allocation5 + $0x2c] sm:$0xf]
    %v123 = vld [vmem:[#allocation5 + $0x30] sm:$0xf]
    %v124 = vld [vmem:[#allocation5 + $0x34] sm:$0xf]
    %v125 = vld [vmem:[#allocation5 + $0x38] sm:$0xf]
    %v126 = vld [vmem:[#allocation5 + $0x3c] sm:$0xf]
    %v127 = vld [vmem:[%s2] sm:$0x1]
    %v129 = vlaneseq
    %v130 = vshrl.u32 %v129, 7
    %v131 = vsub.s32 0, %v130
    %v132 = vrot.slane %v127, %v131
    %v150 = vunpack.c.l.b16 %v111
    %v151 = vunpack.c.l.b16 %v112
    %v152 = vunpack.c.l.b16 %v113
    %v153 = vunpack.c.l.b16 %v114
    %v154 = vunpack.c.l.b16 %v115
    %v155 = vunpack.c.l.b16 %v116
    %v156 = vunpack.c.l.b16 %v117
    %v157 = vunpack.c.l.b16 %v118
    %v158 = vunpack.c.l.b16 %v119
    %v159 = vunpack.c.l.b16 %v120
    %v160 = vunpack.c.l.b16 %v121
    %v161 = vunpack.c.l.b16 %v122
    %v162 = vunpack.c.l.b16 %v123
    %v163 = vunpack.c.l.b16 %v124
    %v164 = vunpack.c.l.b16 %v125
    %v165 = vunpack.c.l.b16 %v126
    %v166 = vpack.c.b16 %v151, %v150
    %v167 = vpack.c.b16 %v153, %v152
    %v168 = vpack.c.b16 %v155, %v154
    %v169 = vpack.c.b16 %v157, %v156
    %v170 = vpack.c.b16 %v159, %v158
    %v171 = vpack.c.b16 %v161, %v160
    %v172 = vpack.c.b16 %v163, %v162
    %v173 = vpack.c.b16 %v165, %v164
    %182 = vmatprep.subr.bf16.mxu0 0
    %183 = vmatpush1.bf16.msra.mxu0 %v166
    %184 = vmatprep.subr.bf16.mxu0 0
    %185 = vmatpush1.bf16.msra.mxu0 %v167
    %186 = vmatprep.subr.bf16.mxu0 0
    %187 = vmatpush1.bf16.msra.mxu0 %v168
    %188 = vmatprep.subr.bf16.mxu0 0
    %189 = vmatpush1.bf16.msra.mxu0 %v169
    %190 = vmatprep.subr.bf16.mxu0 0
    %191 = vmatpush1.bf16.msra.mxu0 %v170
    %192 = vmatprep.subr.bf16.mxu0 0
    %193 = vmatpush1.bf16.msra.mxu0 %v171
    %194 = vmatprep.subr.bf16.mxu0 0
    %195 = vmatpush1.bf16.msra.mxu0 %v172
    %196 = vmatprep.subr.bf16.mxu0 0
    %197 = vmatpush1.bf16.msra.mxu0 %v173
    %198 = vmatprep.subr.bf16.mxu0 0
    %199 = vmatpush1.bf16.msra.mxu0 0
    %200 = vmatprep.subr.bf16.mxu0 0
    %201 = vmatpush1.bf16.msra.mxu0 0
    %202 = vmatprep.subr.bf16.mxu0 0
    %203 = vmatpush1.bf16.msra.mxu0 0
    %204 = vmatprep.subr.bf16.mxu0 0
    %205 = vmatpush1.bf16.msra.mxu0 0
    %206 = vmatprep.subr.bf16.mxu0 0
    %207 = vmatpush1.bf16.msra.mxu0 0
    %208 = vmatprep.subr.bf16.mxu0 0
    %209 = vmatpush1.bf16.msra.mxu0 0
    %210 = vmatprep.subr.bf16.mxu0 0
    %211 = vmatpush1.bf16.msra.mxu0 0
    %212 = vmatprep.subr.bf16.mxu0 0
    %213 = vmatpush1.bf16.msra.mxu0 0
    %214 = vmatprep.mubr.bf16.mxu0 0
    %215 = vmatmul.mubr.bf16.gmra.mrb[0].mxu0 %v110
    %v216 = vpop.f32.mrb[0].mxu0
    %v217 = vadd.f32 %v132, %v216
    %v218 = vpop.f32.mrb[0].mxu0
    %v219 = vpop.f32.mrb[0].mxu0
    %v220 = vadd.f32 %v132, %v219
    %v221 = vpop.f32.mrb[0].mxu0
    %222 = vdwg.mxu0
    %v223 = vmax.f32 %v217, 0.0
    %v224 = vmax.f32 %v220, 0.0
    %v225 = vpack.c.bf16 %v224, %v223
    %v226 = vld [vmem:[#allocation7] sm:$0xf]
    %v227 = vld [vmem:[#allocation7 + $0x4] sm:$0xf]
    %v228 = vld [vmem:[#allocation7 + $0x8] sm:$0xf]
    %v229 = vld [vmem:[#allocation7 + $0xc] sm:$0xf]
    %v230 = vld [vmem:[#allocation7 + $0x10] sm:$0xf]
    %v231 = vld [vmem:[#allocation7 + $0x14] sm:$0xf]
    %v232 = vld [vmem:[#allocation7 + $0x18] sm:$0xf]
    %v233 = vld [vmem:[#allocation7 + $0x1c] sm:$0xf]
    %v234 = vld [vmem:[#allocation7 + $0x20] sm:$0xf]
    %v235 = vld [vmem:[#allocation7 + $0x24] sm:$0xf]
    %v236 = vld [vmem:[#allocation7 + $0x28] sm:$0xf]
    %v237 = vld [vmem:[#allocation7 + $0x2c] sm:$0xf]
    %v238 = vld [vmem:[#allocation7 + $0x30] sm:$0xf]
    %v239 = vld [vmem:[#allocation7 + $0x34] sm:$0xf]
    %v240 = vld [vmem:[#allocation7 + $0x38] sm:$0xf]
    %v241 = vld [vmem:[#allocation7 + $0x3c] sm:$0xf]
    %v242 = vld [vmem:[%s4] sm:$0x1]
    %v244 = vlaneseq
    %v245 = vshrl.u32 %v244, 7
    %v246 = vsub.s32 0, %v245
    %v247 = vrot.slane %v242, %v246
    %v265 = vunpack.c.l.b16 %v226
    %v266 = vunpack.c.l.b16 %v227
    %v267 = vunpack.c.l.b16 %v228
    %v268 = vunpack.c.l.b16 %v229
    %v269 = vunpack.c.l.b16 %v230
    %v270 = vunpack.c.l.b16 %v231
    %v271 = vunpack.c.l.b16 %v232
    %v272 = vunpack.c.l.b16 %v233
    %v273 = vunpack.c.l.b16 %v234
    %v274 = vunpack.c.l.b16 %v235
    %v275 = vunpack.c.l.b16 %v236
    %v276 = vunpack.c.l.b16 %v237
    %v277 = vunpack.c.l.b16 %v238
    %v278 = vunpack.c.l.b16 %v239
    %v279 = vunpack.c.l.b16 %v240
    %v280 = vunpack.c.l.b16 %v241
    %v281 = vpack.c.b16 %v266, %v265
    %v282 = vpack.c.b16 %v268, %v267
    %v283 = vpack.c.b16 %v270, %v269
    %v284 = vpack.c.b16 %v272, %v271
    %v285 = vpack.c.b16 %v274, %v273
    %v286 = vpack.c.b16 %v276, %v275
    %v287 = vpack.c.b16 %v278, %v277
    %v288 = vpack.c.b16 %v280, %v279
    %297 = vmatprep.subr.bf16.mxu0 0
    %298 = vmatpush1.bf16.msra.mxu0 %v281
    %299 = vmatprep.subr.bf16.mxu0 0
    %300 = vmatpush1.bf16.msra.mxu0 %v282
    %301 = vmatprep.subr.bf16.mxu0 0
    %302 = vmatpush1.bf16.msra.mxu0 %v283
    %303 = vmatprep.subr.bf16.mxu0 0
    %304 = vmatpush1.bf16.msra.mxu0 %v284
    %305 = vmatprep.subr.bf16.mxu0 0
    %306 = vmatpush1.bf16.msra.mxu0 %v285
    %307 = vmatprep.subr.bf16.mxu0 0
    %308 = vmatpush1.bf16.msra.mxu0 %v286
    %309 = vmatprep.subr.bf16.mxu0 0
    %310 = vmatpush1.bf16.msra.mxu0 %v287
    %311 = vmatprep.subr.bf16.mxu0 0
    %312 = vmatpush1.bf16.msra.mxu0 %v288
    %313 = vmatprep.subr.bf16.mxu0 0
    %314 = vmatpush1.bf16.msra.mxu0 0
    %315 = vmatprep.subr.bf16.mxu0 0
    %316 = vmatpush1.bf16.msra.mxu0 0
    %317 = vmatprep.subr.bf16.mxu0 0
    %318 = vmatpush1.bf16.msra.mxu0 0
    %319 = vmatprep.subr.bf16.mxu0 0
    %320 = vmatpush1.bf16.msra.mxu0 0
    %321 = vmatprep.subr.bf16.mxu0 0
    %322 = vmatpush1.bf16.msra.mxu0 0
    %323 = vmatprep.subr.bf16.mxu0 0
    %324 = vmatpush1.bf16.msra.mxu0 0
    %325 = vmatprep.subr.bf16.mxu0 0
    %326 = vmatpush1.bf16.msra.mxu0 0
    %327 = vmatprep.subr.bf16.mxu0 0
    %328 = vmatpush1.bf16.msra.mxu0 0
    %329 = vmatprep.mubr.bf16.mxu0 0
    %330 = vmatmul.mubr.bf16.gmra.mrb[0].mxu0 %v225
    %v331 = vpop.f32.mrb[0].mxu0
    %v332 = vadd.f32 %v247, %v331
    %v333 = vpop.f32.mrb[0].mxu0
    %v334 = vpop.f32.mrb[0].mxu0
    %v335 = vadd.f32 %v247, %v334
    %v336 = vpop.f32.mrb[0].mxu0
    %337 = vdwg.mxu0
    %v338 = vmul.f32 %v332, %v332
    %v339 = vmul.f32 %v335, %v335
    %340 = vadd.xlane.f32.xlu0 %v338
    %v341 = vpop.xlane.xlu0 %340
    %342 = vadd.xlane.f32.xlu0 %v339
    %v343 = vpop.xlane.xlu0 %342
    %v344 = vmax.f32 %v341, 1e-24
    %v345 = vmax.f32 %v343, 1e-24
    %v346 = vrsqrt.pop %v344
    %v347 = vrsqrt.pop %v345
    %v348 = vmul.f32 %v332, %v346
    %v349 = vmul.f32 %v335, %v347
    %350 = vst [vmem:[#allocation11] sm:$0xff] %v348
    %351 = vst [vmem:[#allocation11 + $0x8] sm:$0xff] %v349
    %v352 = vld [vmem:[%s5] sm:$0xff]
    %v353 = vld [vmem:[%s5 + $0x8] sm:$0xff]
    %v354 = vpack.c.bf16 %v353, %v352
    %v355 = vld [vmem:[#allocation8] sm:$0xf]
    %v356 = vld [vmem:[#allocation8 + $0x4] sm:$0xf]
    %v357 = vld [vmem:[#allocation8 + $0x8] sm:$0xf]
    %v358 = vld [vmem:[#allocation8 + $0xc] sm:$0xf]
    %v359 = vld [vmem:[#allocation8 + $0x10] sm:$0xf]
    %v360 = vld [vmem:[#allocation8 + $0x14] sm:$0xf]
    %v361 = vld [vmem:[#allocation8 + $0x18] sm:$0xf]
    %v362 = vld [vmem:[#allocation8 + $0x1c] sm:$0xf]
    %v363 = vld [vmem:[#allocation8 + $0x20] sm:$0xf]
    %v364 = vld [vmem:[#allocation8 + $0x24] sm:$0xf]
    %v365 = vld [vmem:[#allocation8 + $0x28] sm:$0xf]
    %v366 = vld [vmem:[#allocation8 + $0x2c] sm:$0xf]
    %v367 = vld [vmem:[#allocation8 + $0x30] sm:$0xf]
    %v368 = vld [vmem:[#allocation8 + $0x34] sm:$0xf]
    %v369 = vld [vmem:[#allocation8 + $0x38] sm:$0xf]
    %v370 = vld [vmem:[#allocation8 + $0x3c] sm:$0xf]
    %v371 = vld [vmem:[%s7] sm:$0x1]
    %v373 = vlaneseq
    %v374 = vshrl.u32 %v373, 7
    %v375 = vsub.s32 0, %v374
    %v376 = vrot.slane %v371, %v375
    %v394 = vunpack.c.l.b16 %v355
    %v395 = vunpack.c.l.b16 %v356
    %v396 = vunpack.c.l.b16 %v357
    %v397 = vunpack.c.l.b16 %v358
    %v398 = vunpack.c.l.b16 %v359
    %v399 = vunpack.c.l.b16 %v360
    %v400 = vunpack.c.l.b16 %v361
    %v401 = vunpack.c.l.b16 %v362
    %v402 = vunpack.c.l.b16 %v363
    %v403 = vunpack.c.l.b16 %v364
    %v404 = vunpack.c.l.b16 %v365
    %v405 = vunpack.c.l.b16 %v366
    %v406 = vunpack.c.l.b16 %v367
    %v407 = vunpack.c.l.b16 %v368
    %v408 = vunpack.c.l.b16 %v369
    %v409 = vunpack.c.l.b16 %v370
    %v410 = vpack.c.b16 %v395, %v394
    %v411 = vpack.c.b16 %v397, %v396
    %v412 = vpack.c.b16 %v399, %v398
    %v413 = vpack.c.b16 %v401, %v400
    %v414 = vpack.c.b16 %v403, %v402
    %v415 = vpack.c.b16 %v405, %v404
    %v416 = vpack.c.b16 %v407, %v406
    %v417 = vpack.c.b16 %v409, %v408
    %426 = vmatprep.subr.bf16.mxu0 0
    %427 = vmatpush1.bf16.msra.mxu0 %v410
    %428 = vmatprep.subr.bf16.mxu0 0
    %429 = vmatpush1.bf16.msra.mxu0 %v411
    %430 = vmatprep.subr.bf16.mxu0 0
    %431 = vmatpush1.bf16.msra.mxu0 %v412
    %432 = vmatprep.subr.bf16.mxu0 0
    %433 = vmatpush1.bf16.msra.mxu0 %v413
    %434 = vmatprep.subr.bf16.mxu0 0
    %435 = vmatpush1.bf16.msra.mxu0 %v414
    %436 = vmatprep.subr.bf16.mxu0 0
    %437 = vmatpush1.bf16.msra.mxu0 %v415
    %438 = vmatprep.subr.bf16.mxu0 0
    %439 = vmatpush1.bf16.msra.mxu0 %v416
    %440 = vmatprep.subr.bf16.mxu0 0
    %441 = vmatpush1.bf16.msra.mxu0 %v417
    %442 = vmatprep.subr.bf16.mxu0 0
    %443 = vmatpush1.bf16.msra.mxu0 0
    %444 = vmatprep.subr.bf16.mxu0 0
    %445 = vmatpush1.bf16.msra.mxu0 0
    %446 = vmatprep.subr.bf16.mxu0 0
    %447 = vmatpush1.bf16.msra.mxu0 0
    %448 = vmatprep.subr.bf16.mxu0 0
    %449 = vmatpush1.bf16.msra.mxu0 0
    %450 = vmatprep.subr.bf16.mxu0 0
    %451 = vmatpush1.bf16.msra.mxu0 0
    %452 = vmatprep.subr.bf16.mxu0 0
    %453 = vmatpush1.bf16.msra.mxu0 0
    %454 = vmatprep.subr.bf16.mxu0 0
    %455 = vmatpush1.bf16.msra.mxu0 0
    %456 = vmatprep.subr.bf16.mxu0 0
    %457 = vmatpush1.bf16.msra.mxu0 0
    %458 = vmatprep.mubr.bf16.mxu0 0
    %459 = vmatmul.mubr.bf16.gmra.mrb[0].mxu0 %v354
    %v460 = vpop.f32.mrb[0].mxu0
    %v461 = vadd.f32 %v376, %v460
    %v462 = vpop.f32.mrb[0].mxu0
    %v463 = vpop.f32.mrb[0].mxu0
    %v464 = vadd.f32 %v376, %v463
    %v465 = vpop.f32.mrb[0].mxu0
    %466 = vdwg.mxu0
    %v467 = vmax.f32 %v461, 0.0
    %v468 = vmax.f32 %v464, 0.0
    %v469 = vpack.c.bf16 %v468, %v467
    %v470 = vld [vmem:[#allocation10] sm:$0xf]
    %v471 = vld [vmem:[#allocation10 + $0x4] sm:$0xf]
    %v472 = vld [vmem:[#allocation10 + $0x8] sm:$0xf]
    %v473 = vld [vmem:[#allocation10 + $0xc] sm:$0xf]
    %v474 = vld [vmem:[#allocation10 + $0x10] sm:$0xf]
    %v475 = vld [vmem:[#allocation10 + $0x14] sm:$0xf]
    %v476 = vld [vmem:[#allocation10 + $0x18] sm:$0xf]
    %v477 = vld [vmem:[#allocation10 + $0x1c] sm:$0xf]
    %v478 = vld [vmem:[#allocation10 + $0x20] sm:$0xf]
    %v479 = vld [vmem:[#allocation10 + $0x24] sm:$0xf]
    %v480 = vld [vmem:[#allocation10 + $0x28] sm:$0xf]
    %v481 = vld [vmem:[#allocation10 + $0x2c] sm:$0xf]
    %v482 = vld [vmem:[#allocation10 + $0x30] sm:$0xf]
    %v483 = vld [vmem:[#allocation10 + $0x34] sm:$0xf]
    %v484 = vld [vmem:[#allocation10 + $0x38] sm:$0xf]
    %v485 = vld [vmem:[#allocation10 + $0x3c] sm:$0xf]
    %v486 = vld [vmem:[%s9] sm:$0x1]
    %v488 = vlaneseq
    %v489 = vshrl.u32 %v488, 7
    %v490 = vsub.s32 0, %v489
    %v491 = vrot.slane %v486, %v490
    %v509 = vunpack.c.l.b16 %v470
    %v510 = vunpack.c.l.b16 %v471
    %v511 = vunpack.c.l.b16 %v472
    %v512 = vunpack.c.l.b16 %v473
    %v513 = vunpack.c.l.b16 %v474
    %v514 = vunpack.c.l.b16 %v475
    %v515 = vunpack.c.l.b16 %v476
    %v516 = vunpack.c.l.b16 %v477
    %v517 = vunpack.c.l.b16 %v478
    %v518 = vunpack.c.l.b16 %v479
    %v519 = vunpack.c.l.b16 %v480
    %v520 = vunpack.c.l.b16 %v481
    %v521 = vunpack.c.l.b16 %v482
    %v522 = vunpack.c.l.b16 %v483
    %v523 = vunpack.c.l.b16 %v484
    %v524 = vunpack.c.l.b16 %v485
    %v525 = vpack.c.b16 %v510, %v509
    %v526 = vpack.c.b16 %v512, %v511
    %v527 = vpack.c.b16 %v514, %v513
    %v528 = vpack.c.b16 %v516, %v515
    %v529 = vpack.c.b16 %v518, %v517
    %v530 = vpack.c.b16 %v520, %v519
    %v531 = vpack.c.b16 %v522, %v521
    %v532 = vpack.c.b16 %v524, %v523
    %541 = vmatprep.subr.bf16.mxu0 0
    %542 = vmatpush1.bf16.msra.mxu0 %v525
    %543 = vmatprep.subr.bf16.mxu0 0
    %544 = vmatpush1.bf16.msra.mxu0 %v526
    %545 = vmatprep.subr.bf16.mxu0 0
    %546 = vmatpush1.bf16.msra.mxu0 %v527
    %547 = vmatprep.subr.bf16.mxu0 0
    %548 = vmatpush1.bf16.msra.mxu0 %v528
    %549 = vmatprep.subr.bf16.mxu0 0
    %550 = vmatpush1.bf16.msra.mxu0 %v529
    %551 = vmatprep.subr.bf16.mxu0 0
    %552 = vmatpush1.bf16.msra.mxu0 %v530
    %553 = vmatprep.subr.bf16.mxu0 0
    %554 = vmatpush1.bf16.msra.mxu0 %v531
    %555 = vmatprep.subr.bf16.mxu0 0
    %556 = vmatpush1.bf16.msra.mxu0 %v532
    %557 = vmatprep.subr.bf16.mxu0 0
    %558 = vmatpush1.bf16.msra.mxu0 0
    %559 = vmatprep.subr.bf16.mxu0 0
    %560 = vmatpush1.bf16.msra.mxu0 0
    %561 = vmatprep.subr.bf16.mxu0 0
    %562 = vmatpush1.bf16.msra.mxu0 0
    %563 = vmatprep.subr.bf16.mxu0 0
    %564 = vmatpush1.bf16.msra.mxu0 0
    %565 = vmatprep.subr.bf16.mxu0 0
    %566 = vmatpush1.bf16.msra.mxu0 0
    %567 = vmatprep.subr.bf16.mxu0 0
    %568 = vmatpush1.bf16.msra.mxu0 0
    %569 = vmatprep.subr.bf16.mxu0 0
    %570 = vmatpush1.bf16.msra.mxu0 0
    %571 = vmatprep.subr.bf16.mxu0 0
    %572 = vmatpush1.bf16.msra.mxu0 0
    %573 = vmatprep.mubr.bf16.mxu0 0
    %574 = vmatmul.mubr.bf16.gmra.mrb[0].mxu0 %v469
    %v575 = vpop.f32.mrb[0].mxu0
    %v576 = vadd.f32 %v491, %v575
    %v577 = vpop.f32.mrb[0].mxu0
    %v578 = vpop.f32.mrb[0].mxu0
    %v579 = vadd.f32 %v491, %v578
    %v580 = vpop.f32.mrb[0].mxu0
    %581 = vdwg.mxu0
    %v582 = vmul.f32 %v576, %v576
    %v583 = vmul.f32 %v579, %v579
    %584 = vadd.xlane.f32.xlu0 %v582
    %v585 = vpop.xlane.xlu0 %584
    %586 = vadd.xlane.f32.xlu0 %v583
    %v587 = vpop.xlane.xlu0 %586
    %v588 = vmax.f32 %v585, 1e-24
    %v589 = vmax.f32 %v587, 1e-24
    %v590 = vrsqrt.pop %v588
    %v591 = vrsqrt.pop %v589
    %v592 = vmul.f32 %v576, %v590
    %v593 = vmul.f32 %v579, %v591
    %594 = vst [vmem:[#allocation12] sm:$0xff] %v592
    %595 = vst [vmem:[#allocation12 + $0x8] sm:$0xff] %v593
    // Predicated region
    $region62: #{tpu_custom_call.1} parent=1 // pred_check
      _
    $region63: #{tpu_custom_call.1} parent=1 // pred_check_branch
      %597 = sbr.rel (0) target = $region65
    $region64: #{tpu_custom_call.1} parent=1 // pred_region
      %s599 = ssub.s32 256, 256
      %600 = vsyncadd [#allocation4], %s599
      %s601 = sshll.u32 [#allocation11], 4
      %s602 = int_to_ptr.vmem [resolvable:$true] %s601
      %607 = dma.vmem_to_hbm [thread:$0]  %s602, 256, %s10, [#allocation4], 128, 128, 8
    $region65: #{tpu_custom_call.1} parent=1 // pred_fallthru
      _
    // Predicated region
    $region66: #{tpu_custom_call.1} parent=1 // pred_check
      _
    $region67: #{tpu_custom_call.1} parent=1 // pred_check_branch
      %609 = sbr.rel (0) target = $region69
    $region68: #{tpu_custom_call.1} parent=1 // pred_region
      %s611 = ssub.s32 256, 256
      %612 = vsyncadd [#allocation13], %s611
      %s613 = sshll.u32 [#allocation12], 4
      %s614 = int_to_ptr.vmem [resolvable:$true] %s613
      %619 = dma.vmem_to_hbm [thread:$0]  %s614, 256, %s11, [#allocation13], 128, 128, 8
    $region69: #{tpu_custom_call.1} parent=1 // pred_fallthru
      _
    // Predicated region
    $region70: #{tpu_custom_call.1} parent=1 // pred_check
      _
    $region71: #{tpu_custom_call.1} parent=1 // pred_check_branch
      %621 = sbr.rel (0) target = $region73
    $region72: #{tpu_custom_call.1} parent=1 // pred_region
      %622 = dma.done [#allocation4], 256
    $region73: #{tpu_custom_call.1} parent=1 // pred_fallthru
      _
    // Predicated region
    $region74: #{tpu_custom_call.1} parent=1 // pred_check
      _
    $region75: #{tpu_custom_call.1} parent=1 // pred_check_branch
      %624 = sbr.rel (0) target = $region77
    $region76: #{tpu_custom_call.1} parent=1 // pred_region
      %625 = dma.done [#allocation13], 256
    $region77: #{tpu_custom_call.1} parent=1 // pred_fallthru
      _
    %626 = vsyncpa [#allocation3], 1
    %627 = vsyncpa [#allocation6], 1
    %628 = vsyncpa [#allocation9], 1
    %629 = vsyncpa [#allocation4], 1
    %630 = vsyncpa [#allocation13], 1

</llo_original>
